<compile_context>
chip_gen: v7x
topology: tpu7x:2x2x1
jax: 0.10.0
libtpu: 0.0.40
codegen_flags: <defaults>
</compile_context>

<pallas_src>
import jax
import jax.numpy as jnp
from jax.experimental import pallas as pl
from jax.experimental.pallas import tpu as pltpu


def _lstm_kernel(pre_ref, whh_ref, wfc_ref, bfc_ref, out_ref):
    # pre_ref : (T, Bp, 4H)  precomputed x*W_ih + (b_ih + b_hh), gates concat i|f|g|o on lanes
    # whh_ref : (H, 4H)      fused hidden->gate weights, so gates = h @ whh
    # wfc_ref : (H, Cp)      fc weight^T, zero-padded to Cp = 128 lanes
    # bfc_ref : (1, Cp)      fc bias, zero-padded
    # out_ref : (T*Bp, Cp)   fc(c_t) for all timesteps, lane-dense
    T, Bp, G = pre_ref.shape
    H = whh_ref.shape[0]
    Cp = out_ref.shape[1]

    whh = whh_ref[...]                       # (H, 4H)  loop-invariant
    wfc = wfc_ref[...]                       # (H, Cp)  loop-invariant
    bfc = jnp.broadcast_to(bfc_ref[...], (Bp, Cp))   # hoisted broadcast

    # Lane mask selecting the g-gate block [2H, 3H) of the fused 4H gate lanes (hoisted).
    lane = jax.lax.broadcasted_iota(jnp.int32, (Bp, G), 1)
    g_mask = (lane >= 2 * H) & (lane < 3 * H)

    h = None
    c = None
    # Static (Python) unroll over T: only serial dependency is the (Bp,H) h/c carry.
    # TODO(synk): switch to lax.fori_loop(..., unroll=4..8) + pl.ds if T grows beyond ~32.
    for t in range(T):
        z = pre_ref[t]                                       # (Bp, 4H) exact vreg tile
        if t > 0:
            # h == c == 0 at t == 0: skip the recurrent matmul entirely.
            z = z + jnp.dot(h, whh, preferred_element_type=jnp.float32)

        # One EUP tanh over the whole tile:
        #   i/f/o lanes: sigmoid(z) = 0.5*tanh(0.5*z) + 0.5
        #   g lanes    : tanh(z)
        arg = jnp.where(g_mask, z, 0.5 * z)
        th = jnp.tanh(arg)
        act = jnp.where(g_mask, th, 0.5 * th + 0.5)          # (Bp, 4H)

        i = act[:, 0:H]
        f = act[:, H:2 * H]
        g = act[:, 2 * H:3 * H]
        o = act[:, 3 * H:4 * H]

        c = i * g if t == 0 else f * c + i * g
        h = o * jnp.tanh(c)

        # fc head for this timestep (the module collects c_t, not h_t).
        # Off the serial chain; lane-dense (Bp, Cp) unmasked store, static row slice.
        out_ref[t * Bp:(t + 1) * Bp, :] = (
            jnp.dot(c, wfc, preferred_element_type=jnp.float32) + bfc)


def rnn_lstm_forward(x, weight_ih, weight_hh, bias_ih, bias_hh, fc_w, fc_b):
    """x: (B, T) float32. Returns (B, T, num_classes)."""
    B, T = x.shape
    H = weight_hh.shape[1]
    C = fc_w.shape[0]

    Bp = max(8, ((B + 7) // 8) * 8)          # pad batch to 8 sublanes
    Cp = max(128, ((C + 127) // 128) * 128)  # pad classes to 128 lanes

    # ---- wrapper-side glue (all embarrassingly parallel / one-off) ----
    x_tm = jnp.transpose(x.astype(jnp.float32), (1, 0))              # (T, B)
    x_tm = jnp.pad(x_tm, ((0, 0), (0, Bp - B)))                       # (T, Bp)

    w_ih_row = weight_ih.astype(jnp.float32)[:, 0]                    # (4H,)  input_size == 1
    b_row = (bias_ih + bias_hh).astype(jnp.float32)                   # (4H,)

    # Precomputed input contribution per timestep, lane-dense: (T, Bp, 4H)
    pre = x_tm[:, :, None] * w_ih_row[None, None, :] + b_row[None, None, :]

    # Fused hidden->gate weights: gates = h @ whh_f, gate order i|f|g|o along 4H lanes.
    whh_f = jnp.transpose(weight_hh.astype(jnp.float32), (1, 0))      # (H, 4H)

    wfc_t = jnp.transpose(fc_w.astype(jnp.float32), (1, 0))           # (H, C)
    wfc_p = jnp.pad(wfc_t, ((0, 0), (0, Cp - C)))                     # (H, Cp)
    bfc_p = jnp.pad(fc_b.astype(jnp.float32), (0, Cp - C)).reshape(1, Cp)

    out_pad = pl.pallas_call(
        _lstm_kernel,
        out_shape=jax.ShapeDtypeStruct((T * Bp, Cp), jnp.float32),
        grid_spec=pltpu.PrefetchScalarGridSpec(
            num_scalar_prefetch=0,
            grid=(1,),
            in_specs=[
                pl.BlockSpec((T, Bp, 4 * H), lambda i: (0, 0, 0)),    # precomputed gate input
                pl.BlockSpec((H, 4 * H), lambda i: (0, 0)),           # fused W_hh^T
                pl.BlockSpec((H, Cp), lambda i: (0, 0)),              # fc weight^T (padded)
                pl.BlockSpec((1, Cp), lambda i: (0, 0)),              # fc bias (padded)
            ],
            out_specs=pl.BlockSpec((T * Bp, Cp), lambda i: (0, 0)),
        ),
        compiler_params=pltpu.CompilerParams(
            dimension_semantics=("arbitrary",)),                       # serial recurrence
    )(pre, whh_f, wfc_p, bfc_p)

    out = out_pad.reshape(T, Bp, Cp)[:, :B, :C]                        # (T, B, C)
    return jnp.transpose(out, (1, 0, 2))                               # (B, T, C)


def rnn_lstm_reference(x, weight_ih, weight_hh, bias_ih, bias_hh, fc_w, fc_b):
    """Pure-JAX reference mirroring the PyTorch module."""
    B, T = x.shape
    H = weight_hh.shape[1]
    h = jnp.zeros((B, H), jnp.float32)
    c = jnp.zeros((B, H), jnp.float32)
    cs = []
    for t in range(T):
        xt = x[:, t:t + 1]
        gates = xt @ weight_ih.T + bias_ih + h @ weight_hh.T + bias_hh
        i, f, g, o = jnp.split(gates, 4, axis=1)
        i = jax.nn.sigmoid(i)
        f = jax.nn.sigmoid(f)
        g = jnp.tanh(g)
        o = jax.nn.sigmoid(o)
        c = f * c + i * g
        h = o * jnp.tanh(c)
        cs.append(c)
    outs = jnp.stack(cs, axis=1)                      # (B, T, H)
    out = outs.reshape(B * T, H) @ fc_w.T + fc_b
    return out.reshape(B, T, -1)


if __name__ == "__main__":
    # Small shapes consistent with the module's forward (input_size must be 1).
    B, T = 2, 8
    input_size, hidden_size, num_layers, num_classes = 1, 32, 1, 10

    key = jax.random.PRNGKey(0)
    ks = jax.random.split(key, 7)
    bound = 1.0 / (hidden_size ** 0.5)

    x = jax.random.normal(ks[0], (B, T), jnp.float32)
    weight_ih = jax.random.uniform(ks[1], (4 * hidden_size, input_size),
                                   jnp.float32, -bound, bound)
    weight_hh = jax.random.uniform(ks[2], (4 * hidden_size, hidden_size),
                                   jnp.float32, -bound, bound)
    bias_ih = jax.random.uniform(ks[3], (4 * hidden_size,), jnp.float32, -bound, bound)
    bias_hh = jax.random.uniform(ks[4], (4 * hidden_size,), jnp.float32, -bound, bound)
    fc_w = jax.random.uniform(ks[5], (num_classes, hidden_size), jnp.float32, -bound, bound)
    fc_b = jax.random.uniform(ks[6], (num_classes,), jnp.float32, -bound, bound)

    out = rnn_lstm_forward(x, weight_ih, weight_hh, bias_ih, bias_hh, fc_w, fc_b)
    out = jax.block_until_ready(out)

    ref = rnn_lstm_reference(x, weight_ih, weight_hh, bias_ih, bias_hh, fc_w, fc_b)
    assert out.shape == (B, T, num_classes), out.shape
    assert jnp.allclose(out, ref, atol=2e-5, rtol=2e-5), float(jnp.max(jnp.abs(out - ref)))

    print("KERNEL_OK")
</pallas_src>

<mosaic_0001>
module attributes {stable_mosaic.version = 11 : i64} {
  func.func @_lstm_kernel(%arg0: i32, %arg1: memref<8x8x128xf32, #tpu.memory_space<vmem>>, %arg2: memref<32x128xf32, #tpu.memory_space<vmem>>, %arg3: memref<32x128xf32, #tpu.memory_space<vmem>>, %arg4: memref<1x128xf32, #tpu.memory_space<vmem>>, %arg5: memref<64x128xf32, #tpu.memory_space<vmem>>) attributes {dimension_semantics = [#tpu.dimension_semantics<arbitrary>], iteration_bounds = array<i64: 1>, scalar_prefetch = 0 : i64, scratch_operands = 0 : i64, tpu.core_type = #tpu.core_type<tc>, window_params = [{pipeline_mode = #tpu.pipeline_mode<synchronous>, transform_indices = @transform_0, window_bounds = array<i64: 8, 8, 128>}, {pipeline_mode = #tpu.pipeline_mode<synchronous>, transform_indices = @transform_1, window_bounds = array<i64: 32, 128>}, {pipeline_mode = #tpu.pipeline_mode<synchronous>, transform_indices = @transform_2, window_bounds = array<i64: 32, 128>}, {pipeline_mode = #tpu.pipeline_mode<synchronous>, transform_indices = @transform_3, window_bounds = array<i64: 1, 128>}, {pipeline_mode = #tpu.pipeline_mode<synchronous>, transform_indices = @transform_4, window_bounds = array<i64: 64, 128>}]} {
    %c0 = arith.constant 0 : index
    %c0_0 = arith.constant 0 : index
    %0 = vector.load %arg2[%c0, %c0_0] : memref<32x128xf32, #tpu.memory_space<vmem>>, vector<32x128xf32>
    %c0_1 = arith.constant 0 : index
    %c0_2 = arith.constant 0 : index
    %1 = vector.load %arg3[%c0_1, %c0_2] : memref<32x128xf32, #tpu.memory_space<vmem>>, vector<32x128xf32>
    %c0_3 = arith.constant 0 : index
    %c0_4 = arith.constant 0 : index
    %2 = vector.load %arg4[%c0_3, %c0_4] : memref<1x128xf32, #tpu.memory_space<vmem>>, vector<1x128xf32>
    %3 = vector.shape_cast %2 : vector<1x128xf32> to vector<1x128xf32>
    %4 = vector.broadcast %3 : vector<1x128xf32> to vector<8x128xf32>
    %5 = tpu.iota {dimensions = array<i32: 1>} : vector<8x128xi32>
    %c64_i32 = arith.constant 64 : i32
    %6 = vector.broadcast %c64_i32 : i32 to vector<8x128xi32>
    %7 = arith.cmpi sge, %5, %6 : vector<8x128xi32>
    %c96_i32 = arith.constant 96 : i32
    %8 = vector.broadcast %c96_i32 : i32 to vector<8x128xi32>
    %9 = arith.cmpi slt, %5, %8 : vector<8x128xi32>
    %10 = arith.andi %7, %9 : vector<8x128xi1>
    %c0_5 = arith.constant 0 : index
    %c0_6 = arith.constant 0 : index
    %c0_7 = arith.constant 0 : index
    %11 = vector.load %arg1[%c0_5, %c0_6, %c0_7] : memref<8x8x128xf32, #tpu.memory_space<vmem>>, vector<1x8x128xf32>
    %12 = vector.shape_cast %11 : vector<1x8x128xf32> to vector<8x128xf32>
    %cst = arith.constant 5.000000e-01 : f32
    %13 = vector.broadcast %cst : f32 to vector<8x128xf32>
    %14 = arith.mulf %13, %12 : vector<8x128xf32>
    %15 = arith.select %10, %12, %14 : vector<8x128xi1>, vector<8x128xf32>
    %16 = math.tanh %15 : vector<8x128xf32>
    %cst_8 = arith.constant 5.000000e-01 : f32
    %17 = vector.broadcast %cst_8 : f32 to vector<8x128xf32>
    %18 = arith.mulf %17, %16 : vector<8x128xf32>
    %cst_9 = arith.constant 5.000000e-01 : f32
    %19 = vector.broadcast %cst_9 : f32 to vector<8x128xf32>
    %20 = arith.addf %18, %19 : vector<8x128xf32>
    %21 = arith.select %10, %16, %20 : vector<8x128xi1>, vector<8x128xf32>
    %22 = vector.extract_strided_slice %21 {offsets = [0, 0], sizes = [8, 32], strides = [1, 1]} : vector<8x128xf32> to vector<8x32xf32>
    %23 = vector.extract_strided_slice %21 {offsets = [0, 64], sizes = [8, 32], strides = [1, 1]} : vector<8x128xf32> to vector<8x32xf32>
    %24 = vector.extract_strided_slice %21 {offsets = [0, 96], sizes = [8, 32], strides = [1, 1]} : vector<8x128xf32> to vector<8x32xf32>
    %25 = arith.mulf %22, %23 : vector<8x32xf32>
    %26 = math.tanh %25 : vector<8x32xf32>
    %27 = arith.mulf %24, %26 : vector<8x32xf32>
    %cst_10 = arith.constant dense<0.000000e+00> : vector<8x128xf32>
    %28 = tpu.matmul %25, %1, %cst_10 {dimension_numbers = #tpu.dot_dimension_numbers<[1], [0], [0], [1], [0, 0, 1, 1], [], []>} : vector<8x32xf32>, vector<32x128xf32>, vector<8x128xf32> -> vector<8x128xf32>
    %29 = arith.addf %28, %4 : vector<8x128xf32>
    %c0_11 = arith.constant 0 : index
    %c0_12 = arith.constant 0 : index
    %30 = vector.load %arg5[%c0_11, %c0_12] : memref<64x128xf32, #tpu.memory_space<vmem>>, vector<8x128xf32>
    tpu.vector_store %arg5[%c0_11, %c0_12], %29 {strides = array<i32>} : memref<64x128xf32, #tpu.memory_space<vmem>>, vector<8x128xf32>,
    %c1 = arith.constant 1 : index
    %c0_13 = arith.constant 0 : index
    %c0_14 = arith.constant 0 : index
    %31 = vector.load %arg1[%c1, %c0_13, %c0_14] : memref<8x8x128xf32, #tpu.memory_space<vmem>>, vector<1x8x128xf32>
    %32 = vector.shape_cast %31 : vector<1x8x128xf32> to vector<8x128xf32>
    %cst_15 = arith.constant dense<0.000000e+00> : vector<8x128xf32>
    %33 = tpu.matmul %27, %0, %cst_15 {dimension_numbers = #tpu.dot_dimension_numbers<[1], [0], [0], [1], [0, 0, 1, 1], [], []>} : vector<8x32xf32>, vector<32x128xf32>, vector<8x128xf32> -> vector<8x128xf32>
    %34 = arith.addf %32, %33 : vector<8x128xf32>
    %cst_16 = arith.constant 5.000000e-01 : f32
    %35 = vector.broadcast %cst_16 : f32 to vector<8x128xf32>
    %36 = arith.mulf %35, %34 : vector<8x128xf32>
    %37 = arith.select %10, %34, %36 : vector<8x128xi1>, vector<8x128xf32>
    %38 = math.tanh %37 : vector<8x128xf32>
    %cst_17 = arith.constant 5.000000e-01 : f32
    %39 = vector.broadcast %cst_17 : f32 to vector<8x128xf32>
    %40 = arith.mulf %39, %38 : vector<8x128xf32>
    %cst_18 = arith.constant 5.000000e-01 : f32
    %41 = vector.broadcast %cst_18 : f32 to vector<8x128xf32>
    %42 = arith.addf %40, %41 : vector<8x128xf32>
    %43 = arith.select %10, %38, %42 : vector<8x128xi1>, vector<8x128xf32>
    %44 = vector.extract_strided_slice %43 {offsets = [0, 0], sizes = [8, 32], strides = [1, 1]} : vector<8x128xf32> to vector<8x32xf32>
    %45 = vector.extract_strided_slice %43 {offsets = [0, 32], sizes = [8, 32], strides = [1, 1]} : vector<8x128xf32> to vector<8x32xf32>
    %46 = vector.extract_strided_slice %43 {offsets = [0, 64], sizes = [8, 32], strides = [1, 1]} : vector<8x128xf32> to vector<8x32xf32>
    %47 = vector.extract_strided_slice %43 {offsets = [0, 96], sizes = [8, 32], strides = [1, 1]} : vector<8x128xf32> to vector<8x32xf32>
    %48 = arith.mulf %45, %25 : vector<8x32xf32>
    %49 = arith.mulf %44, %46 : vector<8x32xf32>
    %50 = arith.addf %48, %49 : vector<8x32xf32>
    %51 = math.tanh %50 : vector<8x32xf32>
    %52 = arith.mulf %47, %51 : vector<8x32xf32>
    %cst_19 = arith.constant dense<0.000000e+00> : vector<8x128xf32>
    %53 = tpu.matmul %50, %1, %cst_19 {dimension_numbers = #tpu.dot_dimension_numbers<[1], [0], [0], [1], [0, 0, 1, 1], [], []>} : vector<8x32xf32>, vector<32x128xf32>, vector<8x128xf32> -> vector<8x128xf32>
    %54 = arith.addf %53, %4 : vector<8x128xf32>
    %c8 = arith.constant 8 : index
    %c0_20 = arith.constant 0 : index
    %55 = vector.load %arg5[%c8, %c0_20] : memref<64x128xf32, #tpu.memory_space<vmem>>, vector<8x128xf32>
    tpu.vector_store %arg5[%c8, %c0_20], %54 {strides = array<i32>} : memref<64x128xf32, #tpu.memory_space<vmem>>, vector<8x128xf32>,
    %c2 = arith.constant 2 : index
    %c0_21 = arith.constant 0 : index
    %c0_22 = arith.constant 0 : index
    %56 = vector.load %arg1[%c2, %c0_21, %c0_22] : memref<8x8x128xf32, #tpu.memory_space<vmem>>, vector<1x8x128xf32>
    %57 = vector.shape_cast %56 : vector<1x8x128xf32> to vector<8x128xf32>
    %cst_23 = arith.constant dense<0.000000e+00> : vector<8x128xf32>
    %58 = tpu.matmul %52, %0, %cst_23 {dimension_numbers = #tpu.dot_dimension_numbers<[1], [0], [0], [1], [0, 0, 1, 1], [], []>} : vector<8x32xf32>, vector<32x128xf32>, vector<8x128xf32> -> vector<8x128xf32>
    %59 = arith.addf %57, %58 : vector<8x128xf32>
    %cst_24 = arith.constant 5.000000e-01 : f32
    %60 = vector.broadcast %cst_24 : f32 to vector<8x128xf32>
    %61 = arith.mulf %60, %59 : vector<8x128xf32>
    %62 = arith.select %10, %59, %61 : vector<8x128xi1>, vector<8x128xf32>
    %63 = math.tanh %62 : vector<8x128xf32>
    %cst_25 = arith.constant 5.000000e-01 : f32
    %64 = vector.broadcast %cst_25 : f32 to vector<8x128xf32>
    %65 = arith.mulf %64, %63 : vector<8x128xf32>
    %cst_26 = arith.constant 5.000000e-01 : f32
    %66 = vector.broadcast %cst_26 : f32 to vector<8x128xf32>
    %67 = arith.addf %65, %66 : vector<8x128xf32>
    %68 = arith.select %10, %63, %67 : vector<8x128xi1>, vector<8x128xf32>
    %69 = vector.extract_strided_slice %68 {offsets = [0, 0], sizes = [8, 32], strides = [1, 1]} : vector<8x128xf32> to vector<8x32xf32>
    %70 = vector.extract_strided_slice %68 {offsets = [0, 32], sizes = [8, 32], strides = [1, 1]} : vector<8x128xf32> to vector<8x32xf32>
    %71 = vector.extract_strided_slice %68 {offsets = [0, 64], sizes = [8, 32], strides = [1, 1]} : vector<8x128xf32> to vector<8x32xf32>
    %72 = vector.extract_strided_slice %68 {offsets = [0, 96], sizes = [8, 32], strides = [1, 1]} : vector<8x128xf32> to vector<8x32xf32>
    %73 = arith.mulf %70, %50 : vector<8x32xf32>
    %74 = arith.mulf %69, %71 : vector<8x32xf32>
    %75 = arith.addf %73, %74 : vector<8x32xf32>
    %76 = math.tanh %75 : vector<8x32xf32>
    %77 = arith.mulf %72, %76 : vector<8x32xf32>
    %cst_27 = arith.constant dense<0.000000e+00> : vector<8x128xf32>
    %78 = tpu.matmul %75, %1, %cst_27 {dimension_numbers = #tpu.dot_dimension_numbers<[1], [0], [0], [1], [0, 0, 1, 1], [], []>} : vector<8x32xf32>, vector<32x128xf32>, vector<8x128xf32> -> vector<8x128xf32>
    %79 = arith.addf %78, %4 : vector<8x128xf32>
    %c16 = arith.constant 16 : index
    %c0_28 = arith.constant 0 : index
    %80 = vector.load %arg5[%c16, %c0_28] : memref<64x128xf32, #tpu.memory_space<vmem>>, vector<8x128xf32>
    tpu.vector_store %arg5[%c16, %c0_28], %79 {strides = array<i32>} : memref<64x128xf32, #tpu.memory_space<vmem>>, vector<8x128xf32>,
    %c3 = arith.constant 3 : index
    %c0_29 = arith.constant 0 : index
    %c0_30 = arith.constant 0 : index
    %81 = vector.load %arg1[%c3, %c0_29, %c0_30] : memref<8x8x128xf32, #tpu.memory_space<vmem>>, vector<1x8x128xf32>
    %82 = vector.shape_cast %81 : vector<1x8x128xf32> to vector<8x128xf32>
    %cst_31 = arith.constant dense<0.000000e+00> : vector<8x128xf32>
    %83 = tpu.matmul %77, %0, %cst_31 {dimension_numbers = #tpu.dot_dimension_numbers<[1], [0], [0], [1], [0, 0, 1, 1], [], []>} : vector<8x32xf32>, vector<32x128xf32>, vector<8x128xf32> -> vector<8x128xf32>
    %84 = arith.addf %82, %83 : vector<8x128xf32>
    %cst_32 = arith.constant 5.000000e-01 : f32
    %85 = vector.broadcast %cst_32 : f32 to vector<8x128xf32>
    %86 = arith.mulf %85, %84 : vector<8x128xf32>
    %87 = arith.select %10, %84, %86 : vector<8x128xi1>, vector<8x128xf32>
    %88 = math.tanh %87 : vector<8x128xf32>
    %cst_33 = arith.constant 5.000000e-01 : f32
    %89 = vector.broadcast %cst_33 : f32 to vector<8x128xf32>
    %90 = arith.mulf %89, %88 : vector<8x128xf32>
    %cst_34 = arith.constant 5.000000e-01 : f32
    %91 = vector.broadcast %cst_34 : f32 to vector<8x128xf32>
    %92 = arith.addf %90, %91 : vector<8x128xf32>
    %93 = arith.select %10, %88, %92 : vector<8x128xi1>, vector<8x128xf32>
    %94 = vector.extract_strided_slice %93 {offsets = [0, 0], sizes = [8, 32], strides = [1, 1]} : vector<8x128xf32> to vector<8x32xf32>
    %95 = vector.extract_strided_slice %93 {offsets = [0, 32], sizes = [8, 32], strides = [1, 1]} : vector<8x128xf32> to vector<8x32xf32>
    %96 = vector.extract_strided_slice %93 {offsets = [0, 64], sizes = [8, 32], strides = [1, 1]} : vector<8x128xf32> to vector<8x32xf32>
    %97 = vector.extract_strided_slice %93 {offsets = [0, 96], sizes = [8, 32], strides = [1, 1]} : vector<8x128xf32> to vector<8x32xf32>
    %98 = arith.mulf %95, %75 : vector<8x32xf32>
    %99 = arith.mulf %94, %96 : vector<8x32xf32>
    %100 = arith.addf %98, %99 : vector<8x32xf32>
    %101 = math.tanh %100 : vector<8x32xf32>
    %102 = arith.mulf %97, %101 : vector<8x32xf32>
    %cst_35 = arith.constant dense<0.000000e+00> : vector<8x128xf32>
    %103 = tpu.matmul %100, %1, %cst_35 {dimension_numbers = #tpu.dot_dimension_numbers<[1], [0], [0], [1], [0, 0, 1, 1], [], []>} : vector<8x32xf32>, vector<32x128xf32>, vector<8x128xf32> -> vector<8x128xf32>
    %104 = arith.addf %103, %4 : vector<8x128xf32>
    %c24 = arith.constant 24 : index
    %c0_36 = arith.constant 0 : index
    %105 = vector.load %arg5[%c24, %c0_36] : memref<64x128xf32, #tpu.memory_space<vmem>>, vector<8x128xf32>
    tpu.vector_store %arg5[%c24, %c0_36], %104 {strides = array<i32>} : memref<64x128xf32, #tpu.memory_space<vmem>>, vector<8x128xf32>,
    %c4 = arith.constant 4 : index
    %c0_37 = arith.constant 0 : index
    %c0_38 = arith.constant 0 : index
    %106 = vector.load %arg1[%c4, %c0_37, %c0_38] : memref<8x8x128xf32, #tpu.memory_space<vmem>>, vector<1x8x128xf32>
    %107 = vector.shape_cast %106 : vector<1x8x128xf32> to vector<8x128xf32>
    %cst_39 = arith.constant dense<0.000000e+00> : vector<8x128xf32>
    %108 = tpu.matmul %102, %0, %cst_39 {dimension_numbers = #tpu.dot_dimension_numbers<[1], [0], [0], [1], [0, 0, 1, 1], [], []>} : vector<8x32xf32>, vector<32x128xf32>, vector<8x128xf32> -> vector<8x128xf32>
    %109 = arith.addf %107, %108 : vector<8x128xf32>
    %cst_40 = arith.constant 5.000000e-01 : f32
    %110 = vector.broadcast %cst_40 : f32 to vector<8x128xf32>
    %111 = arith.mulf %110, %109 : vector<8x128xf32>
    %112 = arith.select %10, %109, %111 : vector<8x128xi1>, vector<8x128xf32>
    %113 = math.tanh %112 : vector<8x128xf32>
    %cst_41 = arith.constant 5.000000e-01 : f32
    %114 = vector.broadcast %cst_41 : f32 to vector<8x128xf32>
    %115 = arith.mulf %114, %113 : vector<8x128xf32>
    %cst_42 = arith.constant 5.000000e-01 : f32
    %116 = vector.broadcast %cst_42 : f32 to vector<8x128xf32>
    %117 = arith.addf %115, %116 : vector<8x128xf32>
    %118 = arith.select %10, %113, %117 : vector<8x128xi1>, vector<8x128xf32>
    %119 = vector.extract_strided_slice %118 {offsets = [0, 0], sizes = [8, 32], strides = [1, 1]} : vector<8x128xf32> to vector<8x32xf32>
    %120 = vector.extract_strided_slice %118 {offsets = [0, 32], sizes = [8, 32], strides = [1, 1]} : vector<8x128xf32> to vector<8x32xf32>
    %121 = vector.extract_strided_slice %118 {offsets = [0, 64], sizes = [8, 32], strides = [1, 1]} : vector<8x128xf32> to vector<8x32xf32>
    %122 = vector.extract_strided_slice %118 {offsets = [0, 96], sizes = [8, 32], strides = [1, 1]} : vector<8x128xf32> to vector<8x32xf32>
    %123 = arith.mulf %120, %100 : vector<8x32xf32>
    %124 = arith.mulf %119, %121 : vector<8x32xf32>
    %125 = arith.addf %123, %124 : vector<8x32xf32>
    %126 = math.tanh %125 : vector<8x32xf32>
    %127 = arith.mulf %122, %126 : vector<8x32xf32>
    %cst_43 = arith.constant dense<0.000000e+00> : vector<8x128xf32>
    %128 = tpu.matmul %125, %1, %cst_43 {dimension_numbers = #tpu.dot_dimension_numbers<[1], [0], [0], [1], [0, 0, 1, 1], [], []>} : vector<8x32xf32>, vector<32x128xf32>, vector<8x128xf32> -> vector<8x128xf32>
    %129 = arith.addf %128, %4 : vector<8x128xf32>
    %c32 = arith.constant 32 : index
    %c0_44 = arith.constant 0 : index
    %130 = vector.load %arg5[%c32, %c0_44] : memref<64x128xf32, #tpu.memory_space<vmem>>, vector<8x128xf32>
    tpu.vector_store %arg5[%c32, %c0_44], %129 {strides = array<i32>} : memref<64x128xf32, #tpu.memory_space<vmem>>, vector<8x128xf32>,
    %c5 = arith.constant 5 : index
    %c0_45 = arith.constant 0 : index
    %c0_46 = arith.constant 0 : index
    %131 = vector.load %arg1[%c5, %c0_45, %c0_46] : memref<8x8x128xf32, #tpu.memory_space<vmem>>, vector<1x8x128xf32>
    %132 = vector.shape_cast %131 : vector<1x8x128xf32> to vector<8x128xf32>
    %cst_47 = arith.constant dense<0.000000e+00> : vector<8x128xf32>
    %133 = tpu.matmul %127, %0, %cst_47 {dimension_numbers = #tpu.dot_dimension_numbers<[1], [0], [0], [1], [0, 0, 1, 1], [], []>} : vector<8x32xf32>, vector<32x128xf32>, vector<8x128xf32> -> vector<8x128xf32>
    %134 = arith.addf %132, %133 : vector<8x128xf32>
    %cst_48 = arith.constant 5.000000e-01 : f32
    %135 = vector.broadcast %cst_48 : f32 to vector<8x128xf32>
    %136 = arith.mulf %135, %134 : vector<8x128xf32>
    %137 = arith.select %10, %134, %136 : vector<8x128xi1>, vector<8x128xf32>
    %138 = math.tanh %137 : vector<8x128xf32>
    %cst_49 = arith.constant 5.000000e-01 : f32
    %139 = vector.broadcast %cst_49 : f32 to vector<8x128xf32>
    %140 = arith.mulf %139, %138 : vector<8x128xf32>
    %cst_50 = arith.constant 5.000000e-01 : f32
    %141 = vector.broadcast %cst_50 : f32 to vector<8x128xf32>
    %142 = arith.addf %140, %141 : vector<8x128xf32>
    %143 = arith.select %10, %138, %142 : vector<8x128xi1>, vector<8x128xf32>
    %144 = vector.extract_strided_slice %143 {offsets = [0, 0], sizes = [8, 32], strides = [1, 1]} : vector<8x128xf32> to vector<8x32xf32>
    %145 = vector.extract_strided_slice %143 {offsets = [0, 32], sizes = [8, 32], strides = [1, 1]} : vector<8x128xf32> to vector<8x32xf32>
    %146 = vector.extract_strided_slice %143 {offsets = [0, 64], sizes = [8, 32], strides = [1, 1]} : vector<8x128xf32> to vector<8x32xf32>
    %147 = vector.extract_strided_slice %143 {offsets = [0, 96], sizes = [8, 32], strides = [1, 1]} : vector<8x128xf32> to vector<8x32xf32>
    %148 = arith.mulf %145, %125 : vector<8x32xf32>
    %149 = arith.mulf %144, %146 : vector<8x32xf32>
    %150 = arith.addf %148, %149 : vector<8x32xf32>
    %151 = math.tanh %150 : vector<8x32xf32>
    %152 = arith.mulf %147, %151 : vector<8x32xf32>
    %cst_51 = arith.constant dense<0.000000e+00> : vector<8x128xf32>
    %153 = tpu.matmul %150, %1, %cst_51 {dimension_numbers = #tpu.dot_dimension_numbers<[1], [0], [0], [1], [0, 0, 1, 1], [], []>} : vector<8x32xf32>, vector<32x128xf32>, vector<8x128xf32> -> vector<8x128xf32>
    %154 = arith.addf %153, %4 : vector<8x128xf32>
    %c40 = arith.constant 40 : index
    %c0_52 = arith.constant 0 : index
    %155 = vector.load %arg5[%c40, %c0_52] : memref<64x128xf32, #tpu.memory_space<vmem>>, vector<8x128xf32>
    tpu.vector_store %arg5[%c40, %c0_52], %154 {strides = array<i32>} : memref<64x128xf32, #tpu.memory_space<vmem>>, vector<8x128xf32>,
    %c6 = arith.constant 6 : index
    %c0_53 = arith.constant 0 : index
    %c0_54 = arith.constant 0 : index
    %156 = vector.load %arg1[%c6, %c0_53, %c0_54] : memref<8x8x128xf32, #tpu.memory_space<vmem>>, vector<1x8x128xf32>
    %157 = vector.shape_cast %156 : vector<1x8x128xf32> to vector<8x128xf32>
    %cst_55 = arith.constant dense<0.000000e+00> : vector<8x128xf32>
    %158 = tpu.matmul %152, %0, %cst_55 {dimension_numbers = #tpu.dot_dimension_numbers<[1], [0], [0], [1], [0, 0, 1, 1], [], []>} : vector<8x32xf32>, vector<32x128xf32>, vector<8x128xf32> -> vector<8x128xf32>
    %159 = arith.addf %157, %158 : vector<8x128xf32>
    %cst_56 = arith.constant 5.000000e-01 : f32
    %160 = vector.broadcast %cst_56 : f32 to vector<8x128xf32>
    %161 = arith.mulf %160, %159 : vector<8x128xf32>
    %162 = arith.select %10, %159, %161 : vector<8x128xi1>, vector<8x128xf32>
    %163 = math.tanh %162 : vector<8x128xf32>
    %cst_57 = arith.constant 5.000000e-01 : f32
    %164 = vector.broadcast %cst_57 : f32 to vector<8x128xf32>
    %165 = arith.mulf %164, %163 : vector<8x128xf32>
    %cst_58 = arith.constant 5.000000e-01 : f32
    %166 = vector.broadcast %cst_58 : f32 to vector<8x128xf32>
    %167 = arith.addf %165, %166 : vector<8x128xf32>
    %168 = arith.select %10, %163, %167 : vector<8x128xi1>, vector<8x128xf32>
    %169 = vector.extract_strided_slice %168 {offsets = [0, 0], sizes = [8, 32], strides = [1, 1]} : vector<8x128xf32> to vector<8x32xf32>
    %170 = vector.extract_strided_slice %168 {offsets = [0, 32], sizes = [8, 32], strides = [1, 1]} : vector<8x128xf32> to vector<8x32xf32>
    %171 = vector.extract_strided_slice %168 {offsets = [0, 64], sizes = [8, 32], strides = [1, 1]} : vector<8x128xf32> to vector<8x32xf32>
    %172 = vector.extract_strided_slice %168 {offsets = [0, 96], sizes = [8, 32], strides = [1, 1]} : vector<8x128xf32> to vector<8x32xf32>
    %173 = arith.mulf %170, %150 : vector<8x32xf32>
    %174 = arith.mulf %169, %171 : vector<8x32xf32>
    %175 = arith.addf %173, %174 : vector<8x32xf32>
    %176 = math.tanh %175 : vector<8x32xf32>
    %177 = arith.mulf %172, %176 : vector<8x32xf32>
    %cst_59 = arith.constant dense<0.000000e+00> : vector<8x128xf32>
    %178 = tpu.matmul %175, %1, %cst_59 {dimension_numbers = #tpu.dot_dimension_numbers<[1], [0], [0], [1], [0, 0, 1, 1], [], []>} : vector<8x32xf32>, vector<32x128xf32>, vector<8x128xf32> -> vector<8x128xf32>
    %179 = arith.addf %178, %4 : vector<8x128xf32>
    %c48 = arith.constant 48 : index
    %c0_60 = arith.constant 0 : index
    %180 = vector.load %arg5[%c48, %c0_60] : memref<64x128xf32, #tpu.memory_space<vmem>>, vector<8x128xf32>
    tpu.vector_store %arg5[%c48, %c0_60], %179 {strides = array<i32>} : memref<64x128xf32, #tpu.memory_space<vmem>>, vector<8x128xf32>,
    %c7 = arith.constant 7 : index
    %c0_61 = arith.constant 0 : index
    %c0_62 = arith.constant 0 : index
    %181 = vector.load %arg1[%c7, %c0_61, %c0_62] : memref<8x8x128xf32, #tpu.memory_space<vmem>>, vector<1x8x128xf32>
    %182 = vector.shape_cast %181 : vector<1x8x128xf32> to vector<8x128xf32>
    %cst_63 = arith.constant dense<0.000000e+00> : vector<8x128xf32>
    %183 = tpu.matmul %177, %0, %cst_63 {dimension_numbers = #tpu.dot_dimension_numbers<[1], [0], [0], [1], [0, 0, 1, 1], [], []>} : vector<8x32xf32>, vector<32x128xf32>, vector<8x128xf32> -> vector<8x128xf32>
    %184 = arith.addf %182, %183 : vector<8x128xf32>
    %cst_64 = arith.constant 5.000000e-01 : f32
    %185 = vector.broadcast %cst_64 : f32 to vector<8x128xf32>
    %186 = arith.mulf %185, %184 : vector<8x128xf32>
    %187 = arith.select %10, %184, %186 : vector<8x128xi1>, vector<8x128xf32>
    %188 = math.tanh %187 : vector<8x128xf32>
    %cst_65 = arith.constant 5.000000e-01 : f32
    %189 = vector.broadcast %cst_65 : f32 to vector<8x128xf32>
    %190 = arith.mulf %189, %188 : vector<8x128xf32>
    %cst_66 = arith.constant 5.000000e-01 : f32
    %191 = vector.broadcast %cst_66 : f32 to vector<8x128xf32>
    %192 = arith.addf %190, %191 : vector<8x128xf32>
    %193 = arith.select %10, %188, %192 : vector<8x128xi1>, vector<8x128xf32>
    %194 = vector.extract_strided_slice %193 {offsets = [0, 0], sizes = [8, 32], strides = [1, 1]} : vector<8x128xf32> to vector<8x32xf32>
    %195 = vector.extract_strided_slice %193 {offsets = [0, 32], sizes = [8, 32], strides = [1, 1]} : vector<8x128xf32> to vector<8x32xf32>
    %196 = vector.extract_strided_slice %193 {offsets = [0, 64], sizes = [8, 32], strides = [1, 1]} : vector<8x128xf32> to vector<8x32xf32>
    %197 = arith.mulf %195, %175 : vector<8x32xf32>
    %198 = arith.mulf %194, %196 : vector<8x32xf32>
    %199 = arith.addf %197, %198 : vector<8x32xf32>
    %cst_67 = arith.constant dense<0.000000e+00> : vector<8x128xf32>
    %200 = tpu.matmul %199, %1, %cst_67 {dimension_numbers = #tpu.dot_dimension_numbers<[1], [0], [0], [1], [0, 0, 1, 1], [], []>} : vector<8x32xf32>, vector<32x128xf32>, vector<8x128xf32> -> vector<8x128xf32>
    %201 = arith.addf %200, %4 : vector<8x128xf32>
    %c56 = arith.constant 56 : index
    %c0_68 = arith.constant 0 : index
    %202 = vector.load %arg5[%c56, %c0_68] : memref<64x128xf32, #tpu.memory_space<vmem>>, vector<8x128xf32>
    tpu.vector_store %arg5[%c56, %c0_68], %201 {strides = array<i32>} : memref<64x128xf32, #tpu.memory_space<vmem>>, vector<8x128xf32>,
    return
  }
  func.func @transform_0(%arg0: i32) -> (i32, i32, i32) {
    %c0_i32 = arith.constant 0 : i32
    %c0_i32_0 = arith.constant 0 : i32
    %c0_i32_1 = arith.constant 0 : i32
    %c0_i32_2 = arith.constant 0 : i32
    return %c0_i32, %c0_i32_0, %c0_i32_1 : i32, i32, i32
  }
  func.func @transform_1(%arg0: i32) -> (i32, i32) {
    %c0_i32 = arith.constant 0 : i32
    %c0_i32_0 = arith.constant 0 : i32
    %c0_i32_1 = arith.constant 0 : i32
    return %c0_i32, %c0_i32_0 : i32, i32
  }
  func.func @transform_2(%arg0: i32) -> (i32, i32) {
    %c0_i32 = arith.constant 0 : i32
    %c0_i32_0 = arith.constant 0 : i32
    %c0_i32_1 = arith.constant 0 : i32
    return %c0_i32, %c0_i32_0 : i32, i32
  }
  func.func @transform_3(%arg0: i32) -> (i32, i32) {
    %c0_i32 = arith.constant 0 : i32
    %c0_i32_0 = arith.constant 0 : i32
    %c0_i32_1 = arith.constant 0 : i32
    return %c0_i32, %c0_i32_0 : i32, i32
  }
  func.func @transform_4(%arg0: i32) -> (i32, i32) {
    %c0_i32 = arith.constant 0 : i32
    %c0_i32_0 = arith.constant 0 : i32
    %c0_i32_1 = arith.constant 0 : i32
    return %c0_i32, %c0_i32_0 : i32, i32
  }
}

</mosaic_0001>

<llo_original>
// kernel: tpu_custom_call.1
$region0: #{tpu_custom_call.1}
  #allocation0 [shape = 'u32[]', space=smem, size = 0x4, offset = 0x4, fixed_abs, tag = 'smem constant byte address 0x4 - core index']
  #allocation1 [shape = 'u32[144,128]{1,0:T(1,128)}', space=vmem, size = 0x12000, scoped, tag = 'internal scratch']
  %s0 = inlined_call_operand.hbm [shape: f32[8,8,128], index: 0, kind: input, shape index: {}]
  %s1 = inlined_call_operand.hbm [shape: f32[32,128], index: 1, kind: input, shape index: {}]
  %s2 = inlined_call_operand.hbm [shape: f32[32,128], index: 2, kind: input, shape index: {}]
  %s3 = inlined_call_operand.vmem [shape: f32[1,128], index: 3, kind: input, shape index: {}]
  %s4 = inlined_call_operand.hbm [shape: f32[64,128], index: 4, kind: output, shape index: {}]
  %s5 = sld [smem:[#allocation0]]
  $region38: #{tpu_custom_call.1} parent=0
    _
  %s7 = ssub.s32 1, %s5
  %s8 = scalar_select 0, %s7, %s5
  $region1: #{tpu_custom_call.1} parent=0
    #allocation2 [shape = 'u8[32768]{0}', space=vmem, size = 0x8000, scoped, tag = 'input window, operand 0, single buffered']
    #allocation3 [shape = 's32[1]{0}', space=sflag, size = 0x4, scoped, tag = 'scoped memory for tpu_custom_call.1']
    #allocation4 [shape = 's32[1]{0}', space=sflag, size = 0x4, scoped, tag = 'scoped memory for tpu_custom_call.1']
    #allocation5 [shape = 'u8[16384]{0}', space=vmem, size = 0x4000, scoped, tag = 'input window, operand 1, single buffered']
    #allocation6 [shape = 's32[1]{0}', space=sflag, size = 0x4, scoped, tag = 'scoped memory for tpu_custom_call.1']
    #allocation7 [shape = 'u8[16384]{0}', space=vmem, size = 0x4000, scoped, tag = 'input window, operand 2, single buffered']
    #allocation8 [shape = 'u8[32768]{0}', space=vmem, size = 0x8000, scoped, tag = 'output window, operand 0, single buffered']
    %9 = vsyncpa [#allocation3], 0
    %10 = vsyncpa [#allocation6], 0
    %11 = vsyncpa [#allocation4], 0
    // Predicated region
    $region2: #{tpu_custom_call.1} parent=1 // pred_check
      _
    $region3: #{tpu_custom_call.1} parent=1 // pred_check_branch
      %13 = sbr.rel (0) target = $region5
    $region4: #{tpu_custom_call.1} parent=1 // pred_region
      %s15 = ssub.s32 1024, 1024
      %16 = vsyncadd [#allocation3], %s15
      %s17 = sshll.u32 [#allocation2], 4
      %s18 = int_to_ptr.vmem [resolvable:$true] %s17
      %23 = dma.hbm_to_vmem [thread:$0]  %s0, 1024, %s18, [#allocation3], 128, 128, 8
    $region5: #{tpu_custom_call.1} parent=1 // pred_fallthru
      _
    // Predicated region
    $region6: #{tpu_custom_call.1} parent=1 // pred_check
      _
    $region7: #{tpu_custom_call.1} parent=1 // pred_check_branch
      %25 = sbr.rel (0) target = $region9
    $region8: #{tpu_custom_call.1} parent=1 // pred_region
      %s27 = ssub.s32 512, 512
      %28 = vsyncadd [#allocation6], %s27
      %s29 = sshll.u32 [#allocation5], 4
      %s30 = int_to_ptr.vmem [resolvable:$true] %s29
      %35 = dma.hbm_to_vmem [thread:$0]  %s1, 512, %s30, [#allocation6], 128, 128, 8
    $region9: #{tpu_custom_call.1} parent=1 // pred_fallthru
      _
    // Predicated region
    $region10: #{tpu_custom_call.1} parent=1 // pred_check
      _
    $region11: #{tpu_custom_call.1} parent=1 // pred_check_branch
      %37 = sbr.rel (0) target = $region13
    $region12: #{tpu_custom_call.1} parent=1 // pred_region
      %s39 = ssub.s32 512, 512
      %40 = vsyncadd [#allocation6], %s39
      %s41 = sshll.u32 [#allocation7], 4
      %s42 = int_to_ptr.vmem [resolvable:$true] %s41
      %47 = dma.hbm_to_vmem [thread:$0]  %s2, 512, %s42, [#allocation6], 128, 128, 8
    $region13: #{tpu_custom_call.1} parent=1 // pred_fallthru
      _
    // Predicated region
    $region14: #{tpu_custom_call.1} parent=1 // pred_check
      _
    $region15: #{tpu_custom_call.1} parent=1 // pred_check_branch
      %49 = sbr.rel (0) target = $region17
    $region16: #{tpu_custom_call.1} parent=1 // pred_region
      _
    $region17: #{tpu_custom_call.1} parent=1 // pred_fallthru
      _
    // Predicated region
    $region18: #{tpu_custom_call.1} parent=1 // pred_check
      _
    $region19: #{tpu_custom_call.1} parent=1 // pred_check_branch
      %51 = sbr.rel (0) target = $region21
    $region20: #{tpu_custom_call.1} parent=1 // pred_region
      %52 = dma.done [#allocation3], 1024
    $region21: #{tpu_custom_call.1} parent=1 // pred_fallthru
      _
    // Predicated region
    $region22: #{tpu_custom_call.1} parent=1 // pred_check
      _
    $region23: #{tpu_custom_call.1} parent=1 // pred_check_branch
      %54 = sbr.rel (0) target = $region25
    $region24: #{tpu_custom_call.1} parent=1 // pred_region
      %55 = dma.done [#allocation6], 512
    $region25: #{tpu_custom_call.1} parent=1 // pred_fallthru
      _
    // Predicated region
    $region26: #{tpu_custom_call.1} parent=1 // pred_check
      _
    $region27: #{tpu_custom_call.1} parent=1 // pred_check_branch
      %57 = sbr.rel (0) target = $region29
    $region28: #{tpu_custom_call.1} parent=1 // pred_region
      %58 = dma.done [#allocation6], 512
    $region29: #{tpu_custom_call.1} parent=1 // pred_fallthru
      _
    %v59 = vld [vmem:[#allocation5] sm:$0xff]
    %v60 = vld [vmem:[#allocation5 + $0x8] sm:$0xff]
    %v61 = vld [vmem:[#allocation5 + $0x10] sm:$0xff]
    %v62 = vld [vmem:[#allocation5 + $0x18] sm:$0xff]
    %v63 = vld [vmem:[#allocation7] sm:$0xff]
    %v64 = vld [vmem:[#allocation7 + $0x8] sm:$0xff]
    %v65 = vld [vmem:[#allocation7 + $0x10] sm:$0xff]
    %v66 = vld [vmem:[#allocation7 + $0x18] sm:$0xff]
    %v67 = vld [vmem:[%s3] sm:$0x1]
    %v69 = vlaneseq
    %v70 = vshrl.u32 %v69, 7
    %v71 = vsub.s32 0, %v70
    %v72 = vrot.slane %v67, %v71
    %v74 = vlaneseq
    %v75 = vand.u32 %v74, 127
    %vm76 = vcmp.ge.s32.totalorder %v75, 64
    %vm77 = vcmp.lt.s32.totalorder %v75, 96
    %vm78 = vmand %vm76, %vm77
    %v79 = vld [vmem:[#allocation2] sm:$0xff]
    %v80 = vmul.f32 %v79, 0.5
    %v81 = vsel %vm78, %v79, %v80
    %v82 = vtanh.pop %v81
    %v83 = vmul.f32 %v82, 0.5
    %v84 = vadd.f32 %v83, 0.5
    %v85 = vsel %vm78, %v82, %v84
    %87 = vrot.lane.b32.xlu0 %v85, 64
    %v88 = vpop.permute.xlu0 %87
    %v90 = vmul.f32 %v85, %v88
    %v91 = vtanh.pop %v90
    %93 = vrot.lane.b32.xlu0 %v91, 96
    %v94 = vpop.permute.xlu0 %93
    %v96 = vmul.f32 %v85, %v94
    %vm97 = vcmask 261120
    %v99 = vsel %vm97, %v90, 0
    %101 = vmatprep.subr.mxu0 0.0
    %102 = vmatpush1.msra.mxu0 %v63
    %103 = vmatprep.subr.mxu0 0.0
    %104 = vmatpush1.msra.mxu0 %v64
    %105 = vmatprep.subr.mxu0 0.0
    %106 = vmatpush1.msra.mxu0 %v65
    %107 = vmatprep.subr.mxu0 0.0
    %108 = vmatpush1.msra.mxu0 %v66
    %109 = vmatprep.subr.mxu0 0.0
    %110 = vmatpush1.msra.mxu0 0.0
    %111 = vmatprep.subr.mxu0 0.0
    %112 = vmatpush1.msra.mxu0 0.0
    %113 = vmatprep.subr.mxu0 0.0
    %114 = vmatpush1.msra.mxu0 0.0
    %115 = vmatprep.subr.mxu0 0.0
    %116 = vmatpush1.msra.mxu0 0.0
    %117 = vmatprep.subr.mxu0 0.0
    %118 = vmatpush1.msra.mxu0 0.0
    %119 = vmatprep.subr.mxu0 0.0
    %120 = vmatpush1.msra.mxu0 0.0
    %121 = vmatprep.subr.mxu0 0.0
    %122 = vmatpush1.msra.mxu0 0.0
    %123 = vmatprep.subr.mxu0 0.0
    %124 = vmatpush1.msra.mxu0 0.0
    %125 = vmatprep.subr.mxu0 0.0
    %126 = vmatpush1.msra.mxu0 0.0
    %127 = vmatprep.subr.mxu0 0.0
    %128 = vmatpush1.msra.mxu0 0.0
    %129 = vmatprep.subr.mxu0 0.0
    %130 = vmatpush1.msra.mxu0 0.0
    %131 = vmatprep.subr.mxu0 0.0
    %132 = vmatpush1.msra.mxu0 0.0
    %133 = vmatprep.subr.mxu0 0.0
    %134 = vmatpush1.msra.mxu0 0.0
    %135 = vmatprep.subr.mxu0 0.0
    %136 = vmatpush1.msra.mxu0 0.0
    %137 = vmatprep.subr.mxu0 0.0
    %138 = vmatpush1.msra.mxu0 0.0
    %139 = vmatprep.subr.mxu0 0.0
    %140 = vmatpush1.msra.mxu0 0.0
    %141 = vmatprep.subr.mxu0 0.0
    %142 = vmatpush1.msra.mxu0 0.0
    %143 = vmatprep.subr.mxu0 0.0
    %144 = vmatpush1.msra.mxu0 0.0
    %145 = vmatprep.subr.mxu0 0.0
    %146 = vmatpush1.msra.mxu0 0.0
    %147 = vmatprep.subr.mxu0 0.0
    %148 = vmatpush1.msra.mxu0 0.0
    %149 = vmatprep.subr.mxu0 0.0
    %150 = vmatpush1.msra.mxu0 0.0
    %151 = vmatprep.subr.mxu0 0.0
    %152 = vmatpush1.msra.mxu0 0.0
    %153 = vmatprep.subr.mxu0 0.0
    %154 = vmatpush1.msra.mxu0 0.0
    %155 = vmatprep.subr.mxu0 0.0
    %156 = vmatpush1.msra.mxu0 0.0
    %157 = vmatprep.subr.mxu0 0.0
    %158 = vmatpush1.msra.mxu0 0.0
    %159 = vmatprep.subr.mxu0 0.0
    %160 = vmatpush1.msra.mxu0 0.0
    %161 = vmatprep.subr.mxu0 0.0
    %162 = vmatpush1.msra.mxu0 0.0
    %163 = vmatprep.subr.mxu0 0.0
    %164 = vmatpush1.msra.mxu0 0.0
    %165 = vmatprep.mubr.f32.mxu0 0.0
    %166 = vmatmul.mubr.f32.gmra.mrb[0].mxu0 %v99
    %v167 = vpop.f32.mrb[0].mxu0
    %v168 = vadd.f32 %v72, %v167
    %v169 = vpop.f32.mrb[0].mxu0
    %170 = vdwg.mxu0
    %171 = vst [vmem:[#allocation8] sm:$0xff] %v168
    %s172 = scalar_lea.vmem [#allocation2], 8
    %v173 = vld [vmem:[%s172] sm:$0xff]
    %175 = vrot.lane.b32.xlu0 %v96, 32
    %v176 = vpop.permute.xlu0 %175
    %v177 = vsel %vm97, %v176, 0
    %179 = vmatprep.subr.mxu0 0.0
    %180 = vmatpush1.msra.mxu0 %v59
    %181 = vmatprep.subr.mxu0 0.0
    %182 = vmatpush1.msra.mxu0 %v60
    %183 = vmatprep.subr.mxu0 0.0
    %184 = vmatpush1.msra.mxu0 %v61
    %185 = vmatprep.subr.mxu0 0.0
    %186 = vmatpush1.msra.mxu0 %v62
    %187 = vmatprep.subr.mxu0 0.0
    %188 = vmatpush1.msra.mxu0 0.0
    %189 = vmatprep.subr.mxu0 0.0
    %190 = vmatpush1.msra.mxu0 0.0
    %191 = vmatprep.subr.mxu0 0.0
    %192 = vmatpush1.msra.mxu0 0.0
    %193 = vmatprep.subr.mxu0 0.0
    %194 = vmatpush1.msra.mxu0 0.0
    %195 = vmatprep.subr.mxu0 0.0
    %196 = vmatpush1.msra.mxu0 0.0
    %197 = vmatprep.subr.mxu0 0.0
    %198 = vmatpush1.msra.mxu0 0.0
    %199 = vmatprep.subr.mxu0 0.0
    %200 = vmatpush1.msra.mxu0 0.0
    %201 = vmatprep.subr.mxu0 0.0
    %202 = vmatpush1.msra.mxu0 0.0
    %203 = vmatprep.subr.mxu0 0.0
    %204 = vmatpush1.msra.mxu0 0.0
    %205 = vmatprep.subr.mxu0 0.0
    %206 = vmatpush1.msra.mxu0 0.0
    %207 = vmatprep.subr.mxu0 0.0
    %208 = vmatpush1.msra.mxu0 0.0
    %209 = vmatprep.subr.mxu0 0.0
    %210 = vmatpush1.msra.mxu0 0.0
    %211 = vmatprep.subr.mxu0 0.0
    %212 = vmatpush1.msra.mxu0 0.0
    %213 = vmatprep.subr.mxu0 0.0
    %214 = vmatpush1.msra.mxu0 0.0
    %215 = vmatprep.subr.mxu0 0.0
    %216 = vmatpush1.msra.mxu0 0.0
    %217 = vmatprep.subr.mxu0 0.0
    %218 = vmatpush1.msra.mxu0 0.0
    %219 = vmatprep.subr.mxu0 0.0
    %220 = vmatpush1.msra.mxu0 0.0
    %221 = vmatprep.subr.mxu0 0.0
    %222 = vmatpush1.msra.mxu0 0.0
    %223 = vmatprep.subr.mxu0 0.0
    %224 = vmatpush1.msra.mxu0 0.0
    %225 = vmatprep.subr.mxu0 0.0
    %226 = vmatpush1.msra.mxu0 0.0
    %227 = vmatprep.subr.mxu0 0.0
    %228 = vmatpush1.msra.mxu0 0.0
    %229 = vmatprep.subr.mxu0 0.0
    %230 = vmatpush1.msra.mxu0 0.0
    %231 = vmatprep.subr.mxu0 0.0
    %232 = vmatpush1.msra.mxu0 0.0
    %233 = vmatprep.subr.mxu0 0.0
    %234 = vmatpush1.msra.mxu0 0.0
    %235 = vmatprep.subr.mxu0 0.0
    %236 = vmatpush1.msra.mxu0 0.0
    %237 = vmatprep.subr.mxu0 0.0
    %238 = vmatpush1.msra.mxu0 0.0
    %239 = vmatprep.subr.mxu0 0.0
    %240 = vmatpush1.msra.mxu0 0.0
    %241 = vmatprep.subr.mxu0 0.0
    %242 = vmatpush1.msra.mxu0 0.0
    %243 = vmatprep.mubr.f32.mxu0 0.0
    %244 = vmatmul.mubr.f32.gmra.mrb[0].mxu0 %v177
    %v245 = vpop.f32.mrb[0].mxu0
    %v246 = vadd.f32 0.0, %v245
    %v247 = vpop.f32.mrb[0].mxu0
    %248 = vdwg.mxu0
    %v249 = vadd.f32 %v173, %v246
    %v250 = vmul.f32 %v249, 0.5
    %v251 = vsel %vm78, %v249, %v250
    %v252 = vtanh.pop %v251
    %v253 = vmul.f32 %v252, 0.5
    %v254 = vadd.f32 %v253, 0.5
    %v255 = vsel %vm78, %v252, %v254
    %256 = vrot.lane.b32.xlu0 %v90, 32
    %v257 = vpop.permute.xlu0 %256
    %v259 = vmul.f32 %v255, %v257
    %261 = vrot.lane.b32.xlu0 %v255, 64
    %v262 = vpop.permute.xlu0 %261
    %v264 = vmul.f32 %v255, %v262
    %266 = vrot.lane.b32.xlu0 %v264, 32
    %v267 = vpop.permute.xlu0 %266
    %v269 = vadd.f32 %v259, %v267
    %v270 = vtanh.pop %v269
    %272 = vrot.lane.b32.xlu0 %v270, 64
    %v273 = vpop.permute.xlu0 %272
    %v275 = vmul.f32 %v255, %v273
    %277 = vrot.lane.b32.xlu0 %v269, 96
    %v278 = vpop.permute.xlu0 %277
    %v279 = vsel %vm97, %v278, 0
    %281 = vmatprep.subr.mxu0 0.0
    %282 = vmatpush1.msra.mxu0 %v63
    %283 = vmatprep.subr.mxu0 0.0
    %284 = vmatpush1.msra.mxu0 %v64
    %285 = vmatprep.subr.mxu0 0.0
    %286 = vmatpush1.msra.mxu0 %v65
    %287 = vmatprep.subr.mxu0 0.0
    %288 = vmatpush1.msra.mxu0 %v66
    %289 = vmatprep.subr.mxu0 0.0
    %290 = vmatpush1.msra.mxu0 0.0
    %291 = vmatprep.subr.mxu0 0.0
    %292 = vmatpush1.msra.mxu0 0.0
    %293 = vmatprep.subr.mxu0 0.0
    %294 = vmatpush1.msra.mxu0 0.0
    %295 = vmatprep.subr.mxu0 0.0
    %296 = vmatpush1.msra.mxu0 0.0
    %297 = vmatprep.subr.mxu0 0.0
    %298 = vmatpush1.msra.mxu0 0.0
    %299 = vmatprep.subr.mxu0 0.0
    %300 = vmatpush1.msra.mxu0 0.0
    %301 = vmatprep.subr.mxu0 0.0
    %302 = vmatpush1.msra.mxu0 0.0
    %303 = vmatprep.subr.mxu0 0.0
    %304 = vmatpush1.msra.mxu0 0.0
    %305 = vmatprep.subr.mxu0 0.0
    %306 = vmatpush1.msra.mxu0 0.0
    %307 = vmatprep.subr.mxu0 0.0
    %308 = vmatpush1.msra.mxu0 0.0
    %309 = vmatprep.subr.mxu0 0.0
    %310 = vmatpush1.msra.mxu0 0.0
    %311 = vmatprep.subr.mxu0 0.0
    %312 = vmatpush1.msra.mxu0 0.0
    %313 = vmatprep.subr.mxu0 0.0
    %314 = vmatpush1.msra.mxu0 0.0
    %315 = vmatprep.subr.mxu0 0.0
    %316 = vmatpush1.msra.mxu0 0.0
    %317 = vmatprep.subr.mxu0 0.0
    %318 = vmatpush1.msra.mxu0 0.0
    %319 = vmatprep.subr.mxu0 0.0
    %320 = vmatpush1.msra.mxu0 0.0
    %321 = vmatprep.subr.mxu0 0.0
    %322 = vmatpush1.msra.mxu0 0.0
    %323 = vmatprep.subr.mxu0 0.0
    %324 = vmatpush1.msra.mxu0 0.0
    %325 = vmatprep.subr.mxu0 0.0
    %326 = vmatpush1.msra.mxu0 0.0
    %327 = vmatprep.subr.mxu0 0.0
    %328 = vmatpush1.msra.mxu0 0.0
    %329 = vmatprep.subr.mxu0 0.0
    %330 = vmatpush1.msra.mxu0 0.0
    %331 = vmatprep.subr.mxu0 0.0
    %332 = vmatpush1.msra.mxu0 0.0
    %333 = vmatprep.subr.mxu0 0.0
    %334 = vmatpush1.msra.mxu0 0.0
    %335 = vmatprep.subr.mxu0 0.0
    %336 = vmatpush1.msra.mxu0 0.0
    %337 = vmatprep.subr.mxu0 0.0
    %338 = vmatpush1.msra.mxu0 0.0
    %339 = vmatprep.subr.mxu0 0.0
    %340 = vmatpush1.msra.mxu0 0.0
    %341 = vmatprep.subr.mxu0 0.0
    %342 = vmatpush1.msra.mxu0 0.0
    %343 = vmatprep.subr.mxu0 0.0
    %344 = vmatpush1.msra.mxu0 0.0
    %345 = vmatprep.mubr.f32.mxu0 0.0
    %346 = vmatmul.mubr.f32.gmra.mrb[0].mxu0 %v279
    %v347 = vpop.f32.mrb[0].mxu0
    %v348 = vadd.f32 %v72, %v347
    %v349 = vpop.f32.mrb[0].mxu0
    %350 = vdwg.mxu0
    %351 = vst [vmem:[#allocation8 + $0x8] sm:$0xff] %v348
    %s352 = scalar_lea.vmem [#allocation2], 16
    %v353 = vld [vmem:[%s352] sm:$0xff]
    %355 = vrot.lane.b32.xlu0 %v275, 32
    %v356 = vpop.permute.xlu0 %355
    %v357 = vsel %vm97, %v356, 0
    %359 = vmatprep.subr.mxu0 0.0
    %360 = vmatpush1.msra.mxu0 %v59
    %361 = vmatprep.subr.mxu0 0.0
    %362 = vmatpush1.msra.mxu0 %v60
    %363 = vmatprep.subr.mxu0 0.0
    %364 = vmatpush1.msra.mxu0 %v61
    %365 = vmatprep.subr.mxu0 0.0
    %366 = vmatpush1.msra.mxu0 %v62
    %367 = vmatprep.subr.mxu0 0.0
    %368 = vmatpush1.msra.mxu0 0.0
    %369 = vmatprep.subr.mxu0 0.0
    %370 = vmatpush1.msra.mxu0 0.0
    %371 = vmatprep.subr.mxu0 0.0
    %372 = vmatpush1.msra.mxu0 0.0
    %373 = vmatprep.subr.mxu0 0.0
    %374 = vmatpush1.msra.mxu0 0.0
    %375 = vmatprep.subr.mxu0 0.0
    %376 = vmatpush1.msra.mxu0 0.0
    %377 = vmatprep.subr.mxu0 0.0
    %378 = vmatpush1.msra.mxu0 0.0
    %379 = vmatprep.subr.mxu0 0.0
    %380 = vmatpush1.msra.mxu0 0.0
    %381 = vmatprep.subr.mxu0 0.0
    %382 = vmatpush1.msra.mxu0 0.0
    %383 = vmatprep.subr.mxu0 0.0
    %384 = vmatpush1.msra.mxu0 0.0
    %385 = vmatprep.subr.mxu0 0.0
    %386 = vmatpush1.msra.mxu0 0.0
    %387 = vmatprep.subr.mxu0 0.0
    %388 = vmatpush1.msra.mxu0 0.0
    %389 = vmatprep.subr.mxu0 0.0
    %390 = vmatpush1.msra.mxu0 0.0
    %391 = vmatprep.subr.mxu0 0.0
    %392 = vmatpush1.msra.mxu0 0.0
    %393 = vmatprep.subr.mxu0 0.0
    %394 = vmatpush1.msra.mxu0 0.0
    %395 = vmatprep.subr.mxu0 0.0
    %396 = vmatpush1.msra.mxu0 0.0
    %397 = vmatprep.subr.mxu0 0.0
    %398 = vmatpush1.msra.mxu0 0.0
    %399 = vmatprep.subr.mxu0 0.0
    %400 = vmatpush1.msra.mxu0 0.0
    %401 = vmatprep.subr.mxu0 0.0
    %402 = vmatpush1.msra.mxu0 0.0
    %403 = vmatprep.subr.mxu0 0.0
    %404 = vmatpush1.msra.mxu0 0.0
    %405 = vmatprep.subr.mxu0 0.0
    %406 = vmatpush1.msra.mxu0 0.0
    %407 = vmatprep.subr.mxu0 0.0
    %408 = vmatpush1.msra.mxu0 0.0
    %409 = vmatprep.subr.mxu0 0.0
    %410 = vmatpush1.msra.mxu0 0.0
    %411 = vmatprep.subr.mxu0 0.0
    %412 = vmatpush1.msra.mxu0 0.0
    %413 = vmatprep.subr.mxu0 0.0
    %414 = vmatpush1.msra.mxu0 0.0
    %415 = vmatprep.subr.mxu0 0.0
    %416 = vmatpush1.msra.mxu0 0.0
    %417 = vmatprep.subr.mxu0 0.0
    %418 = vmatpush1.msra.mxu0 0.0
    %419 = vmatprep.subr.mxu0 0.0
    %420 = vmatpush1.msra.mxu0 0.0
    %421 = vmatprep.subr.mxu0 0.0
    %422 = vmatpush1.msra.mxu0 0.0
    %423 = vmatprep.mubr.f32.mxu0 0.0
    %424 = vmatmul.mubr.f32.gmra.mrb[0].mxu0 %v357
    %v425 = vpop.f32.mrb[0].mxu0
    %v426 = vadd.f32 0.0, %v425
    %v427 = vpop.f32.mrb[0].mxu0
    %428 = vdwg.mxu0
    %v429 = vadd.f32 %v353, %v426
    %v430 = vmul.f32 %v429, 0.5
    %v431 = vsel %vm78, %v429, %v430
    %v432 = vtanh.pop %v431
    %v433 = vmul.f32 %v432, 0.5
    %v434 = vadd.f32 %v433, 0.5
    %v435 = vsel %vm78, %v432, %v434
    %v436 = vmul.f32 %v435, %v269
    %438 = vrot.lane.b32.xlu0 %v435, 64
    %v439 = vpop.permute.xlu0 %438
    %v441 = vmul.f32 %v435, %v439
    %443 = vrot.lane.b32.xlu0 %v441, 32
    %v444 = vpop.permute.xlu0 %443
    %v446 = vadd.f32 %v436, %v444
    %v447 = vtanh.pop %v446
    %449 = vrot.lane.b32.xlu0 %v447, 64
    %v450 = vpop.permute.xlu0 %449
    %v452 = vmul.f32 %v435, %v450
    %454 = vrot.lane.b32.xlu0 %v446, 96
    %v455 = vpop.permute.xlu0 %454
    %v456 = vsel %vm97, %v455, 0
    %458 = vmatprep.subr.mxu0 0.0
    %459 = vmatpush1.msra.mxu0 %v63
    %460 = vmatprep.subr.mxu0 0.0
    %461 = vmatpush1.msra.mxu0 %v64
    %462 = vmatprep.subr.mxu0 0.0
    %463 = vmatpush1.msra.mxu0 %v65
    %464 = vmatprep.subr.mxu0 0.0
    %465 = vmatpush1.msra.mxu0 %v66
    %466 = vmatprep.subr.mxu0 0.0
    %467 = vmatpush1.msra.mxu0 0.0
    %468 = vmatprep.subr.mxu0 0.0
    %469 = vmatpush1.msra.mxu0 0.0
    %470 = vmatprep.subr.mxu0 0.0
    %471 = vmatpush1.msra.mxu0 0.0
    %472 = vmatprep.subr.mxu0 0.0
    %473 = vmatpush1.msra.mxu0 0.0
    %474 = vmatprep.subr.mxu0 0.0
    %475 = vmatpush1.msra.mxu0 0.0
    %476 = vmatprep.subr.mxu0 0.0
    %477 = vmatpush1.msra.mxu0 0.0
    %478 = vmatprep.subr.mxu0 0.0
    %479 = vmatpush1.msra.mxu0 0.0
    %480 = vmatprep.subr.mxu0 0.0
    %481 = vmatpush1.msra.mxu0 0.0
    %482 = vmatprep.subr.mxu0 0.0
    %483 = vmatpush1.msra.mxu0 0.0
    %484 = vmatprep.subr.mxu0 0.0
    %485 = vmatpush1.msra.mxu0 0.0
    %486 = vmatprep.subr.mxu0 0.0
    %487 = vmatpush1.msra.mxu0 0.0
    %488 = vmatprep.subr.mxu0 0.0
    %489 = vmatpush1.msra.mxu0 0.0
    %490 = vmatprep.subr.mxu0 0.0
    %491 = vmatpush1.msra.mxu0 0.0
    %492 = vmatprep.subr.mxu0 0.0
    %493 = vmatpush1.msra.mxu0 0.0
    %494 = vmatprep.subr.mxu0 0.0
    %495 = vmatpush1.msra.mxu0 0.0
    %496 = vmatprep.subr.mxu0 0.0
    %497 = vmatpush1.msra.mxu0 0.0
    %498 = vmatprep.subr.mxu0 0.0
    %499 = vmatpush1.msra.mxu0 0.0
    %500 = vmatprep.subr.mxu0 0.0
    %501 = vmatpush1.msra.mxu0 0.0
    %502 = vmatprep.subr.mxu0 0.0
    %503 = vmatpush1.msra.mxu0 0.0
    %504 = vmatprep.subr.mxu0 0.0
    %505 = vmatpush1.msra.mxu0 0.0
    %506 = vmatprep.subr.mxu0 0.0
    %507 = vmatpush1.msra.mxu0 0.0
    %508 = vmatprep.subr.mxu0 0.0
    %509 = vmatpush1.msra.mxu0 0.0
    %510 = vmatprep.subr.mxu0 0.0
    %511 = vmatpush1.msra.mxu0 0.0
    %512 = vmatprep.subr.mxu0 0.0
    %513 = vmatpush1.msra.mxu0 0.0
    %514 = vmatprep.subr.mxu0 0.0
    %515 = vmatpush1.msra.mxu0 0.0
    %516 = vmatprep.subr.mxu0 0.0
    %517 = vmatpush1.msra.mxu0 0.0
    %518 = vmatprep.subr.mxu0 0.0
    %519 = vmatpush1.msra.mxu0 0.0
    %520 = vmatprep.subr.mxu0 0.0
    %521 = vmatpush1.msra.mxu0 0.0
    %522 = vmatprep.mubr.f32.mxu0 0.0
    %523 = vmatmul.mubr.f32.gmra.mrb[0].mxu0 %v456
    %v524 = vpop.f32.mrb[0].mxu0
    %v525 = vadd.f32 %v72, %v524
    %v526 = vpop.f32.mrb[0].mxu0
    %527 = vdwg.mxu0
    %528 = vst [vmem:[#allocation8 + $0x10] sm:$0xff] %v525
    %s529 = scalar_lea.vmem [#allocation2], 24
    %v530 = vld [vmem:[%s529] sm:$0xff]
    %532 = vrot.lane.b32.xlu0 %v452, 32
    %v533 = vpop.permute.xlu0 %532
    %v534 = vsel %vm97, %v533, 0
    %536 = vmatprep.subr.mxu0 0.0
    %537 = vmatpush1.msra.mxu0 %v59
    %538 = vmatprep.subr.mxu0 0.0
    %539 = vmatpush1.msra.mxu0 %v60
    %540 = vmatprep.subr.mxu0 0.0
    %541 = vmatpush1.msra.mxu0 %v61
    %542 = vmatprep.subr.mxu0 0.0
    %543 = vmatpush1.msra.mxu0 %v62
    %544 = vmatprep.subr.mxu0 0.0
    %545 = vmatpush1.msra.mxu0 0.0
    %546 = vmatprep.subr.mxu0 0.0
    %547 = vmatpush1.msra.mxu0 0.0
    %548 = vmatprep.subr.mxu0 0.0
    %549 = vmatpush1.msra.mxu0 0.0
    %550 = vmatprep.subr.mxu0 0.0
    %551 = vmatpush1.msra.mxu0 0.0
    %552 = vmatprep.subr.mxu0 0.0
    %553 = vmatpush1.msra.mxu0 0.0
    %554 = vmatprep.subr.mxu0 0.0
    %555 = vmatpush1.msra.mxu0 0.0
    %556 = vmatprep.subr.mxu0 0.0
    %557 = vmatpush1.msra.mxu0 0.0
    %558 = vmatprep.subr.mxu0 0.0
    %559 = vmatpush1.msra.mxu0 0.0
    %560 = vmatprep.subr.mxu0 0.0
    %561 = vmatpush1.msra.mxu0 0.0
    %562 = vmatprep.subr.mxu0 0.0
    %563 = vmatpush1.msra.mxu0 0.0
    %564 = vmatprep.subr.mxu0 0.0
    %565 = vmatpush1.msra.mxu0 0.0
    %566 = vmatprep.subr.mxu0 0.0
    %567 = vmatpush1.msra.mxu0 0.0
    %568 = vmatprep.subr.mxu0 0.0
    %569 = vmatpush1.msra.mxu0 0.0
    %570 = vmatprep.subr.mxu0 0.0
    %571 = vmatpush1.msra.mxu0 0.0
    %572 = vmatprep.subr.mxu0 0.0
    %573 = vmatpush1.msra.mxu0 0.0
    %574 = vmatprep.subr.mxu0 0.0
    %575 = vmatpush1.msra.mxu0 0.0
    %576 = vmatprep.subr.mxu0 0.0
    %577 = vmatpush1.msra.mxu0 0.0
    %578 = vmatprep.subr.mxu0 0.0
    %579 = vmatpush1.msra.mxu0 0.0
    %580 = vmatprep.subr.mxu0 0.0
    %581 = vmatpush1.msra.mxu0 0.0
    %582 = vmatprep.subr.mxu0 0.0
    %583 = vmatpush1.msra.mxu0 0.0
    %584 = vmatprep.subr.mxu0 0.0
    %585 = vmatpush1.msra.mxu0 0.0
    %586 = vmatprep.subr.mxu0 0.0
    %587 = vmatpush1.msra.mxu0 0.0
    %588 = vmatprep.subr.mxu0 0.0
    %589 = vmatpush1.msra.mxu0 0.0
    %590 = vmatprep.subr.mxu0 0.0
    %591 = vmatpush1.msra.mxu0 0.0
    %592 = vmatprep.subr.mxu0 0.0
    %593 = vmatpush1.msra.mxu0 0.0
    %594 = vmatprep.subr.mxu0 0.0
    %595 = vmatpush1.msra.mxu0 0.0
    %596 = vmatprep.subr.mxu0 0.0
    %597 = vmatpush1.msra.mxu0 0.0
    %598 = vmatprep.subr.mxu0 0.0
    %599 = vmatpush1.msra.mxu0 0.0
    %600 = vmatprep.mubr.f32.mxu0 0.0
    %601 = vmatmul.mubr.f32.gmra.mrb[0].mxu0 %v534
    %v602 = vpop.f32.mrb[0].mxu0
    %v603 = vadd.f32 0.0, %v602
    %v604 = vpop.f32.mrb[0].mxu0
    %605 = vdwg.mxu0
    %v606 = vadd.f32 %v530, %v603
    %v607 = vmul.f32 %v606, 0.5
    %v608 = vsel %vm78, %v606, %v607
    %v609 = vtanh.pop %v608
    %v610 = vmul.f32 %v609, 0.5
    %v611 = vadd.f32 %v610, 0.5
    %v612 = vsel %vm78, %v609, %v611
    %v613 = vmul.f32 %v612, %v446
    %615 = vrot.lane.b32.xlu0 %v612, 64
    %v616 = vpop.permute.xlu0 %615
    %v618 = vmul.f32 %v612, %v616
    %620 = vrot.lane.b32.xlu0 %v618, 32
    %v621 = vpop.permute.xlu0 %620
    %v623 = vadd.f32 %v613, %v621
    %v624 = vtanh.pop %v623
    %626 = vrot.lane.b32.xlu0 %v624, 64
    %v627 = vpop.permute.xlu0 %626
    %v629 = vmul.f32 %v612, %v627
    %631 = vrot.lane.b32.xlu0 %v623, 96
    %v632 = vpop.permute.xlu0 %631
    %v633 = vsel %vm97, %v632, 0
    %635 = vmatprep.subr.mxu0 0.0
    %636 = vmatpush1.msra.mxu0 %v63
    %637 = vmatprep.subr.mxu0 0.0
    %638 = vmatpush1.msra.mxu0 %v64
    %639 = vmatprep.subr.mxu0 0.0
    %640 = vmatpush1.msra.mxu0 %v65
    %641 = vmatprep.subr.mxu0 0.0
    %642 = vmatpush1.msra.mxu0 %v66
    %643 = vmatprep.subr.mxu0 0.0
    %644 = vmatpush1.msra.mxu0 0.0
    %645 = vmatprep.subr.mxu0 0.0
    %646 = vmatpush1.msra.mxu0 0.0
    %647 = vmatprep.subr.mxu0 0.0
    %648 = vmatpush1.msra.mxu0 0.0
    %649 = vmatprep.subr.mxu0 0.0
    %650 = vmatpush1.msra.mxu0 0.0
    %651 = vmatprep.subr.mxu0 0.0
    %652 = vmatpush1.msra.mxu0 0.0
    %653 = vmatprep.subr.mxu0 0.0
    %654 = vmatpush1.msra.mxu0 0.0
    %655 = vmatprep.subr.mxu0 0.0
    %656 = vmatpush1.msra.mxu0 0.0
    %657 = vmatprep.subr.mxu0 0.0
    %658 = vmatpush1.msra.mxu0 0.0
    %659 = vmatprep.subr.mxu0 0.0
    %660 = vmatpush1.msra.mxu0 0.0
    %661 = vmatprep.subr.mxu0 0.0
    %662 = vmatpush1.msra.mxu0 0.0
    %663 = vmatprep.subr.mxu0 0.0
    %664 = vmatpush1.msra.mxu0 0.0
    %665 = vmatprep.subr.mxu0 0.0
    %666 = vmatpush1.msra.mxu0 0.0
    %667 = vmatprep.subr.mxu0 0.0
    %668 = vmatpush1.msra.mxu0 0.0
    %669 = vmatprep.subr.mxu0 0.0
    %670 = vmatpush1.msra.mxu0 0.0
    %671 = vmatprep.subr.mxu0 0.0
    %672 = vmatpush1.msra.mxu0 0.0
    %673 = vmatprep.subr.mxu0 0.0
    %674 = vmatpush1.msra.mxu0 0.0
    %675 = vmatprep.subr.mxu0 0.0
    %676 = vmatpush1.msra.mxu0 0.0
    %677 = vmatprep.subr.mxu0 0.0
    %678 = vmatpush1.msra.mxu0 0.0
    %679 = vmatprep.subr.mxu0 0.0
    %680 = vmatpush1.msra.mxu0 0.0
    %681 = vmatprep.subr.mxu0 0.0
    %682 = vmatpush1.msra.mxu0 0.0
    %683 = vmatprep.subr.mxu0 0.0
    %684 = vmatpush1.msra.mxu0 0.0
    %685 = vmatprep.subr.mxu0 0.0
    %686 = vmatpush1.msra.mxu0 0.0
    %687 = vmatprep.subr.mxu0 0.0
    %688 = vmatpush1.msra.mxu0 0.0
    %689 = vmatprep.subr.mxu0 0.0
    %690 = vmatpush1.msra.mxu0 0.0
    %691 = vmatprep.subr.mxu0 0.0
    %692 = vmatpush1.msra.mxu0 0.0
    %693 = vmatprep.subr.mxu0 0.0
    %694 = vmatpush1.msra.mxu0 0.0
    %695 = vmatprep.subr.mxu0 0.0
    %696 = vmatpush1.msra.mxu0 0.0
    %697 = vmatprep.subr.mxu0 0.0
    %698 = vmatpush1.msra.mxu0 0.0
    %699 = vmatprep.mubr.f32.mxu0 0.0
    %700 = vmatmul.mubr.f32.gmra.mrb[0].mxu0 %v633
    %v701 = vpop.f32.mrb[0].mxu0
    %v702 = vadd.f32 %v72, %v701
    %v703 = vpop.f32.mrb[0].mxu0
    %704 = vdwg.mxu0
    %705 = vst [vmem:[#allocation8 + $0x18] sm:$0xff] %v702
    %s706 = scalar_lea.vmem [#allocation2], 32
    %v707 = vld [vmem:[%s706] sm:$0xff]
    %709 = vrot.lane.b32.xlu0 %v629, 32
    %v710 = vpop.permute.xlu0 %709
    %v711 = vsel %vm97, %v710, 0
    %713 = vmatprep.subr.mxu0 0.0
    %714 = vmatpush1.msra.mxu0 %v59
    %715 = vmatprep.subr.mxu0 0.0
    %716 = vmatpush1.msra.mxu0 %v60
    %717 = vmatprep.subr.mxu0 0.0
    %718 = vmatpush1.msra.mxu0 %v61
    %719 = vmatprep.subr.mxu0 0.0
    %720 = vmatpush1.msra.mxu0 %v62
    %721 = vmatprep.subr.mxu0 0.0
    %722 = vmatpush1.msra.mxu0 0.0
    %723 = vmatprep.subr.mxu0 0.0
    %724 = vmatpush1.msra.mxu0 0.0
    %725 = vmatprep.subr.mxu0 0.0
    %726 = vmatpush1.msra.mxu0 0.0
    %727 = vmatprep.subr.mxu0 0.0
    %728 = vmatpush1.msra.mxu0 0.0
    %729 = vmatprep.subr.mxu0 0.0
    %730 = vmatpush1.msra.mxu0 0.0
    %731 = vmatprep.subr.mxu0 0.0
    %732 = vmatpush1.msra.mxu0 0.0
    %733 = vmatprep.subr.mxu0 0.0
    %734 = vmatpush1.msra.mxu0 0.0
    %735 = vmatprep.subr.mxu0 0.0
    %736 = vmatpush1.msra.mxu0 0.0
    %737 = vmatprep.subr.mxu0 0.0
    %738 = vmatpush1.msra.mxu0 0.0
    %739 = vmatprep.subr.mxu0 0.0
    %740 = vmatpush1.msra.mxu0 0.0
    %741 = vmatprep.subr.mxu0 0.0
    %742 = vmatpush1.msra.mxu0 0.0
    %743 = vmatprep.subr.mxu0 0.0
    %744 = vmatpush1.msra.mxu0 0.0
    %745 = vmatprep.subr.mxu0 0.0
    %746 = vmatpush1.msra.mxu0 0.0
    %747 = vmatprep.subr.mxu0 0.0
    %748 = vmatpush1.msra.mxu0 0.0
    %749 = vmatprep.subr.mxu0 0.0
    %750 = vmatpush1.msra.mxu0 0.0
    %751 = vmatprep.subr.mxu0 0.0
    %752 = vmatpush1.msra.mxu0 0.0
    %753 = vmatprep.subr.mxu0 0.0
    %754 = vmatpush1.msra.mxu0 0.0
    %755 = vmatprep.subr.mxu0 0.0
    %756 = vmatpush1.msra.mxu0 0.0
    %757 = vmatprep.subr.mxu0 0.0
    %758 = vmatpush1.msra.mxu0 0.0
    %759 = vmatprep.subr.mxu0 0.0
    %760 = vmatpush1.msra.mxu0 0.0
    %761 = vmatprep.subr.mxu0 0.0
    %762 = vmatpush1.msra.mxu0 0.0
    %763 = vmatprep.subr.mxu0 0.0
    %764 = vmatpush1.msra.mxu0 0.0
    %765 = vmatprep.subr.mxu0 0.0
    %766 = vmatpush1.msra.mxu0 0.0
    %767 = vmatprep.subr.mxu0 0.0
    %768 = vmatpush1.msra.mxu0 0.0
    %769 = vmatprep.subr.mxu0 0.0
    %770 = vmatpush1.msra.mxu0 0.0
    %771 = vmatprep.subr.mxu0 0.0
    %772 = vmatpush1.msra.mxu0 0.0
    %773 = vmatprep.subr.mxu0 0.0
    %774 = vmatpush1.msra.mxu0 0.0
    %775 = vmatprep.subr.mxu0 0.0
    %776 = vmatpush1.msra.mxu0 0.0
    %777 = vmatprep.mubr.f32.mxu0 0.0
    %778 = vmatmul.mubr.f32.gmra.mrb[0].mxu0 %v711
    %v779 = vpop.f32.mrb[0].mxu0
    %v780 = vadd.f32 0.0, %v779
    %v781 = vpop.f32.mrb[0].mxu0
    %782 = vdwg.mxu0
    %v783 = vadd.f32 %v707, %v780
    %v784 = vmul.f32 %v783, 0.5
    %v785 = vsel %vm78, %v783, %v784
    %v786 = vtanh.pop %v785
    %v787 = vmul.f32 %v786, 0.5
    %v788 = vadd.f32 %v787, 0.5
    %v789 = vsel %vm78, %v786, %v788
    %v790 = vmul.f32 %v789, %v623
    %792 = vrot.lane.b32.xlu0 %v789, 64
    %v793 = vpop.permute.xlu0 %792
    %v795 = vmul.f32 %v789, %v793
    %797 = vrot.lane.b32.xlu0 %v795, 32
    %v798 = vpop.permute.xlu0 %797
    %v800 = vadd.f32 %v790, %v798
    %v801 = vtanh.pop %v800
    %803 = vrot.lane.b32.xlu0 %v801, 64
    %v804 = vpop.permute.xlu0 %803
    %v806 = vmul.f32 %v789, %v804
    %808 = vrot.lane.b32.xlu0 %v800, 96
    %v809 = vpop.permute.xlu0 %808
    %v810 = vsel %vm97, %v809, 0
    %812 = vmatprep.subr.mxu0 0.0
    %813 = vmatpush1.msra.mxu0 %v63
    %814 = vmatprep.subr.mxu0 0.0
    %815 = vmatpush1.msra.mxu0 %v64
    %816 = vmatprep.subr.mxu0 0.0
    %817 = vmatpush1.msra.mxu0 %v65
    %818 = vmatprep.subr.mxu0 0.0
    %819 = vmatpush1.msra.mxu0 %v66
    %820 = vmatprep.subr.mxu0 0.0
    %821 = vmatpush1.msra.mxu0 0.0
    %822 = vmatprep.subr.mxu0 0.0
    %823 = vmatpush1.msra.mxu0 0.0
    %824 = vmatprep.subr.mxu0 0.0
    %825 = vmatpush1.msra.mxu0 0.0
    %826 = vmatprep.subr.mxu0 0.0
    %827 = vmatpush1.msra.mxu0 0.0
    %828 = vmatprep.subr.mxu0 0.0
    %829 = vmatpush1.msra.mxu0 0.0
    %830 = vmatprep.subr.mxu0 0.0
    %831 = vmatpush1.msra.mxu0 0.0
    %832 = vmatprep.subr.mxu0 0.0
    %833 = vmatpush1.msra.mxu0 0.0
    %834 = vmatprep.subr.mxu0 0.0
    %835 = vmatpush1.msra.mxu0 0.0
    %836 = vmatprep.subr.mxu0 0.0
    %837 = vmatpush1.msra.mxu0 0.0
    %838 = vmatprep.subr.mxu0 0.0
    %839 = vmatpush1.msra.mxu0 0.0
    %840 = vmatprep.subr.mxu0 0.0
    %841 = vmatpush1.msra.mxu0 0.0
    %842 = vmatprep.subr.mxu0 0.0
    %843 = vmatpush1.msra.mxu0 0.0
    %844 = vmatprep.subr.mxu0 0.0
    %845 = vmatpush1.msra.mxu0 0.0
    %846 = vmatprep.subr.mxu0 0.0
    %847 = vmatpush1.msra.mxu0 0.0
    %848 = vmatprep.subr.mxu0 0.0
    %849 = vmatpush1.msra.mxu0 0.0
    %850 = vmatprep.subr.mxu0 0.0
    %851 = vmatpush1.msra.mxu0 0.0
    %852 = vmatprep.subr.mxu0 0.0
    %853 = vmatpush1.msra.mxu0 0.0
    %854 = vmatprep.subr.mxu0 0.0
    %855 = vmatpush1.msra.mxu0 0.0
    %856 = vmatprep.subr.mxu0 0.0
    %857 = vmatpush1.msra.mxu0 0.0
    %858 = vmatprep.subr.mxu0 0.0
    %859 = vmatpush1.msra.mxu0 0.0
    %860 = vmatprep.subr.mxu0 0.0
    %861 = vmatpush1.msra.mxu0 0.0
    %862 = vmatprep.subr.mxu0 0.0
    %863 = vmatpush1.msra.mxu0 0.0
    %864 = vmatprep.subr.mxu0 0.0
    %865 = vmatpush1.msra.mxu0 0.0
    %866 = vmatprep.subr.mxu0 0.0
    %867 = vmatpush1.msra.mxu0 0.0
    %868 = vmatprep.subr.mxu0 0.0
    %869 = vmatpush1.msra.mxu0 0.0
    %870 = vmatprep.subr.mxu0 0.0
    %871 = vmatpush1.msra.mxu0 0.0
    %872 = vmatprep.subr.mxu0 0.0
    %873 = vmatpush1.msra.mxu0 0.0
    %874 = vmatprep.subr.mxu0 0.0
    %875 = vmatpush1.msra.mxu0 0.0
    %876 = vmatprep.mubr.f32.mxu0 0.0
    %877 = vmatmul.mubr.f32.gmra.mrb[0].mxu0 %v810
    %v878 = vpop.f32.mrb[0].mxu0
    %v879 = vadd.f32 %v72, %v878
    %v880 = vpop.f32.mrb[0].mxu0
    %881 = vdwg.mxu0
    %882 = vst [vmem:[#allocation8 + $0x20] sm:$0xff] %v879
    %s883 = scalar_lea.vmem [#allocation2], 40
    %v884 = vld [vmem:[%s883] sm:$0xff]
    %886 = vrot.lane.b32.xlu0 %v806, 32
    %v887 = vpop.permute.xlu0 %886
    %v888 = vsel %vm97, %v887, 0
    %890 = vmatprep.subr.mxu0 0.0
    %891 = vmatpush1.msra.mxu0 %v59
    %892 = vmatprep.subr.mxu0 0.0
    %893 = vmatpush1.msra.mxu0 %v60
    %894 = vmatprep.subr.mxu0 0.0
    %895 = vmatpush1.msra.mxu0 %v61
    %896 = vmatprep.subr.mxu0 0.0
    %897 = vmatpush1.msra.mxu0 %v62
    %898 = vmatprep.subr.mxu0 0.0
    %899 = vmatpush1.msra.mxu0 0.0
    %900 = vmatprep.subr.mxu0 0.0
    %901 = vmatpush1.msra.mxu0 0.0
    %902 = vmatprep.subr.mxu0 0.0
    %903 = vmatpush1.msra.mxu0 0.0
    %904 = vmatprep.subr.mxu0 0.0
    %905 = vmatpush1.msra.mxu0 0.0
    %906 = vmatprep.subr.mxu0 0.0
    %907 = vmatpush1.msra.mxu0 0.0
    %908 = vmatprep.subr.mxu0 0.0
    %909 = vmatpush1.msra.mxu0 0.0
    %910 = vmatprep.subr.mxu0 0.0
    %911 = vmatpush1.msra.mxu0 0.0
    %912 = vmatprep.subr.mxu0 0.0
    %913 = vmatpush1.msra.mxu0 0.0
    %914 = vmatprep.subr.mxu0 0.0
    %915 = vmatpush1.msra.mxu0 0.0
    %916 = vmatprep.subr.mxu0 0.0
    %917 = vmatpush1.msra.mxu0 0.0
    %918 = vmatprep.subr.mxu0 0.0
    %919 = vmatpush1.msra.mxu0 0.0
    %920 = vmatprep.subr.mxu0 0.0
    %921 = vmatpush1.msra.mxu0 0.0
    %922 = vmatprep.subr.mxu0 0.0
    %923 = vmatpush1.msra.mxu0 0.0
    %924 = vmatprep.subr.mxu0 0.0
    %925 = vmatpush1.msra.mxu0 0.0
    %926 = vmatprep.subr.mxu0 0.0
    %927 = vmatpush1.msra.mxu0 0.0
    %928 = vmatprep.subr.mxu0 0.0
    %929 = vmatpush1.msra.mxu0 0.0
    %930 = vmatprep.subr.mxu0 0.0
    %931 = vmatpush1.msra.mxu0 0.0
    %932 = vmatprep.subr.mxu0 0.0
    %933 = vmatpush1.msra.mxu0 0.0
    %934 = vmatprep.subr.mxu0 0.0
    %935 = vmatpush1.msra.mxu0 0.0
    %936 = vmatprep.subr.mxu0 0.0
    %937 = vmatpush1.msra.mxu0 0.0
    %938 = vmatprep.subr.mxu0 0.0
    %939 = vmatpush1.msra.mxu0 0.0
    %940 = vmatprep.subr.mxu0 0.0
    %941 = vmatpush1.msra.mxu0 0.0
    %942 = vmatprep.subr.mxu0 0.0
    %943 = vmatpush1.msra.mxu0 0.0
    %944 = vmatprep.subr.mxu0 0.0
    %945 = vmatpush1.msra.mxu0 0.0
    %946 = vmatprep.subr.mxu0 0.0
    %947 = vmatpush1.msra.mxu0 0.0
    %948 = vmatprep.subr.mxu0 0.0
    %949 = vmatpush1.msra.mxu0 0.0
    %950 = vmatprep.subr.mxu0 0.0
    %951 = vmatpush1.msra.mxu0 0.0
    %952 = vmatprep.subr.mxu0 0.0
    %953 = vmatpush1.msra.mxu0 0.0
    %954 = vmatprep.mubr.f32.mxu0 0.0
    %955 = vmatmul.mubr.f32.gmra.mrb[0].mxu0 %v888
    %v956 = vpop.f32.mrb[0].mxu0
    %v957 = vadd.f32 0.0, %v956
    %v958 = vpop.f32.mrb[0].mxu0
    %959 = vdwg.mxu0
    %v960 = vadd.f32 %v884, %v957
    %v961 = vmul.f32 %v960, 0.5
    %v962 = vsel %vm78, %v960, %v961
    %v963 = vtanh.pop %v962
    %v964 = vmul.f32 %v963, 0.5
    %v965 = vadd.f32 %v964, 0.5
    %v966 = vsel %vm78, %v963, %v965
    %v967 = vmul.f32 %v966, %v800
    %969 = vrot.lane.b32.xlu0 %v966, 64
    %v970 = vpop.permute.xlu0 %969
    %v972 = vmul.f32 %v966, %v970
    %974 = vrot.lane.b32.xlu0 %v972, 32
    %v975 = vpop.permute.xlu0 %974
    %v977 = vadd.f32 %v967, %v975
    %v978 = vtanh.pop %v977
    %980 = vrot.lane.b32.xlu0 %v978, 64
    %v981 = vpop.permute.xlu0 %980
    %v983 = vmul.f32 %v966, %v981
    %985 = vrot.lane.b32.xlu0 %v977, 96
    %v986 = vpop.permute.xlu0 %985
    %v987 = vsel %vm97, %v986, 0
    %989 = vmatprep.subr.mxu0 0.0
    %990 = vmatpush1.msra.mxu0 %v63
    %991 = vmatprep.subr.mxu0 0.0
    %992 = vmatpush1.msra.mxu0 %v64
    %993 = vmatprep.subr.mxu0 0.0
    %994 = vmatpush1.msra.mxu0 %v65
    %995 = vmatprep.subr.mxu0 0.0
    %996 = vmatpush1.msra.mxu0 %v66
    %997 = vmatprep.subr.mxu0 0.0
    %998 = vmatpush1.msra.mxu0 0.0
    %999 = vmatprep.subr.mxu0 0.0
    %1000 = vmatpush1.msra.mxu0 0.0
    %1001 = vmatprep.subr.mxu0 0.0
    %1002 = vmatpush1.msra.mxu0 0.0
    %1003 = vmatprep.subr.mxu0 0.0
    %1004 = vmatpush1.msra.mxu0 0.0
    %1005 = vmatprep.subr.mxu0 0.0
    %1006 = vmatpush1.msra.mxu0 0.0
    %1007 = vmatprep.subr.mxu0 0.0
    %1008 = vmatpush1.msra.mxu0 0.0
    %1009 = vmatprep.subr.mxu0 0.0
    %1010 = vmatpush1.msra.mxu0 0.0
    %1011 = vmatprep.subr.mxu0 0.0
    %1012 = vmatpush1.msra.mxu0 0.0
    %1013 = vmatprep.subr.mxu0 0.0
    %1014 = vmatpush1.msra.mxu0 0.0
    %1015 = vmatprep.subr.mxu0 0.0
    %1016 = vmatpush1.msra.mxu0 0.0
    %1017 = vmatprep.subr.mxu0 0.0
    %1018 = vmatpush1.msra.mxu0 0.0
    %1019 = vmatprep.subr.mxu0 0.0
    %1020 = vmatpush1.msra.mxu0 0.0
    %1021 = vmatprep.subr.mxu0 0.0
    %1022 = vmatpush1.msra.mxu0 0.0
    %1023 = vmatprep.subr.mxu0 0.0
    %1024 = vmatpush1.msra.mxu0 0.0
    %1025 = vmatprep.subr.mxu0 0.0
    %1026 = vmatpush1.msra.mxu0 0.0
    %1027 = vmatprep.subr.mxu0 0.0
    %1028 = vmatpush1.msra.mxu0 0.0
    %1029 = vmatprep.subr.mxu0 0.0
    %1030 = vmatpush1.msra.mxu0 0.0
    %1031 = vmatprep.subr.mxu0 0.0
    %1032 = vmatpush1.msra.mxu0 0.0
    %1033 = vmatprep.subr.mxu0 0.0
    %1034 = vmatpush1.msra.mxu0 0.0
    %1035 = vmatprep.subr.mxu0 0.0
    %1036 = vmatpush1.msra.mxu0 0.0
    %1037 = vmatprep.subr.mxu0 0.0
    %1038 = vmatpush1.msra.mxu0 0.0
    %1039 = vmatprep.subr.mxu0 0.0
    %1040 = vmatpush1.msra.mxu0 0.0
    %1041 = vmatprep.subr.mxu0 0.0
    %1042 = vmatpush1.msra.mxu0 0.0
    %1043 = vmatprep.subr.mxu0 0.0
    %1044 = vmatpush1.msra.mxu0 0.0
    %1045 = vmatprep.subr.mxu0 0.0
    %1046 = vmatpush1.msra.mxu0 0.0
    %1047 = vmatprep.subr.mxu0 0.0
    %1048 = vmatpush1.msra.mxu0 0.0
    %1049 = vmatprep.subr.mxu0 0.0
    %1050 = vmatpush1.msra.mxu0 0.0
    %1051 = vmatprep.subr.mxu0 0.0
    %1052 = vmatpush1.msra.mxu0 0.0
    %1053 = vmatprep.mubr.f32.mxu0 0.0
    %1054 = vmatmul.mubr.f32.gmra.mrb[0].mxu0 %v987
    %v1055 = vpop.f32.mrb[0].mxu0
    %v1056 = vadd.f32 %v72, %v1055
    %v1057 = vpop.f32.mrb[0].mxu0
    %1058 = vdwg.mxu0
    %1059 = vst [vmem:[#allocation8 + $0x28] sm:$0xff] %v1056
    %s1060 = scalar_lea.vmem [#allocation2], 48
    %v1061 = vld [vmem:[%s1060] sm:$0xff]
    %1063 = vrot.lane.b32.xlu0 %v983, 32
    %v1064 = vpop.permute.xlu0 %1063
    %v1065 = vsel %vm97, %v1064, 0
    %1067 = vmatprep.subr.mxu0 0.0
    %1068 = vmatpush1.msra.mxu0 %v59
    %1069 = vmatprep.subr.mxu0 0.0
    %1070 = vmatpush1.msra.mxu0 %v60
    %1071 = vmatprep.subr.mxu0 0.0
    %1072 = vmatpush1.msra.mxu0 %v61
    %1073 = vmatprep.subr.mxu0 0.0
    %1074 = vmatpush1.msra.mxu0 %v62
    %1075 = vmatprep.subr.mxu0 0.0
    %1076 = vmatpush1.msra.mxu0 0.0
    %1077 = vmatprep.subr.mxu0 0.0
    %1078 = vmatpush1.msra.mxu0 0.0
    %1079 = vmatprep.subr.mxu0 0.0
    %1080 = vmatpush1.msra.mxu0 0.0
    %1081 = vmatprep.subr.mxu0 0.0
    %1082 = vmatpush1.msra.mxu0 0.0
    %1083 = vmatprep.subr.mxu0 0.0
    %1084 = vmatpush1.msra.mxu0 0.0
    %1085 = vmatprep.subr.mxu0 0.0
    %1086 = vmatpush1.msra.mxu0 0.0
    %1087 = vmatprep.subr.mxu0 0.0
    %1088 = vmatpush1.msra.mxu0 0.0
    %1089 = vmatprep.subr.mxu0 0.0
    %1090 = vmatpush1.msra.mxu0 0.0
    %1091 = vmatprep.subr.mxu0 0.0
    %1092 = vmatpush1.msra.mxu0 0.0
    %1093 = vmatprep.subr.mxu0 0.0
    %1094 = vmatpush1.msra.mxu0 0.0
    %1095 = vmatprep.subr.mxu0 0.0
    %1096 = vmatpush1.msra.mxu0 0.0
    %1097 = vmatprep.subr.mxu0 0.0
    %1098 = vmatpush1.msra.mxu0 0.0
    %1099 = vmatprep.subr.mxu0 0.0
    %1100 = vmatpush1.msra.mxu0 0.0
    %1101 = vmatprep.subr.mxu0 0.0
    %1102 = vmatpush1.msra.mxu0 0.0
    %1103 = vmatprep.subr.mxu0 0.0
    %1104 = vmatpush1.msra.mxu0 0.0
    %1105 = vmatprep.subr.mxu0 0.0
    %1106 = vmatpush1.msra.mxu0 0.0
    %1107 = vmatprep.subr.mxu0 0.0
    %1108 = vmatpush1.msra.mxu0 0.0
    %1109 = vmatprep.subr.mxu0 0.0
    %1110 = vmatpush1.msra.mxu0 0.0
    %1111 = vmatprep.subr.mxu0 0.0
    %1112 = vmatpush1.msra.mxu0 0.0
    %1113 = vmatprep.subr.mxu0 0.0
    %1114 = vmatpush1.msra.mxu0 0.0
    %1115 = vmatprep.subr.mxu0 0.0
    %1116 = vmatpush1.msra.mxu0 0.0
    %1117 = vmatprep.subr.mxu0 0.0
    %1118 = vmatpush1.msra.mxu0 0.0
    %1119 = vmatprep.subr.mxu0 0.0
    %1120 = vmatpush1.msra.mxu0 0.0
    %1121 = vmatprep.subr.mxu0 0.0
    %1122 = vmatpush1.msra.mxu0 0.0
    %1123 = vmatprep.subr.mxu0 0.0
    %1124 = vmatpush1.msra.mxu0 0.0
    %1125 = vmatprep.subr.mxu0 0.0
    %1126 = vmatpush1.msra.mxu0 0.0
    %1127 = vmatprep.subr.mxu0 0.0
    %1128 = vmatpush1.msra.mxu0 0.0
    %1129 = vmatprep.subr.mxu0 0.0
    %1130 = vmatpush1.msra.mxu0 0.0
    %1131 = vmatprep.mubr.f32.mxu0 0.0
    %1132 = vmatmul.mubr.f32.gmra.mrb[0].mxu0 %v1065
    %v1133 = vpop.f32.mrb[0].mxu0
    %v1134 = vadd.f32 0.0, %v1133
    %v1135 = vpop.f32.mrb[0].mxu0
    %1136 = vdwg.mxu0
    %v1137 = vadd.f32 %v1061, %v1134
    %v1138 = vmul.f32 %v1137, 0.5
    %v1139 = vsel %vm78, %v1137, %v1138
    %v1140 = vtanh.pop %v1139
    %v1141 = vmul.f32 %v1140, 0.5
    %v1142 = vadd.f32 %v1141, 0.5
    %v1143 = vsel %vm78, %v1140, %v1142
    %v1144 = vmul.f32 %v1143, %v977
    %1146 = vrot.lane.b32.xlu0 %v1143, 64
    %v1147 = vpop.permute.xlu0 %1146
    %v1149 = vmul.f32 %v1143, %v1147
    %1151 = vrot.lane.b32.xlu0 %v1149, 32
    %v1152 = vpop.permute.xlu0 %1151
    %v1154 = vadd.f32 %v1144, %v1152
    %v1155 = vtanh.pop %v1154
    %1157 = vrot.lane.b32.xlu0 %v1155, 64
    %v1158 = vpop.permute.xlu0 %1157
    %v1160 = vmul.f32 %v1143, %v1158
    %1162 = vrot.lane.b32.xlu0 %v1154, 96
    %v1163 = vpop.permute.xlu0 %1162
    %v1164 = vsel %vm97, %v1163, 0
    %1166 = vmatprep.subr.mxu0 0.0
    %1167 = vmatpush1.msra.mxu0 %v63
    %1168 = vmatprep.subr.mxu0 0.0
    %1169 = vmatpush1.msra.mxu0 %v64
    %1170 = vmatprep.subr.mxu0 0.0
    %1171 = vmatpush1.msra.mxu0 %v65
    %1172 = vmatprep.subr.mxu0 0.0
    %1173 = vmatpush1.msra.mxu0 %v66
    %1174 = vmatprep.subr.mxu0 0.0
    %1175 = vmatpush1.msra.mxu0 0.0
    %1176 = vmatprep.subr.mxu0 0.0
    %1177 = vmatpush1.msra.mxu0 0.0
    %1178 = vmatprep.subr.mxu0 0.0
    %1179 = vmatpush1.msra.mxu0 0.0
    %1180 = vmatprep.subr.mxu0 0.0
    %1181 = vmatpush1.msra.mxu0 0.0
    %1182 = vmatprep.subr.mxu0 0.0
    %1183 = vmatpush1.msra.mxu0 0.0
    %1184 = vmatprep.subr.mxu0 0.0
    %1185 = vmatpush1.msra.mxu0 0.0
    %1186 = vmatprep.subr.mxu0 0.0
    %1187 = vmatpush1.msra.mxu0 0.0
    %1188 = vmatprep.subr.mxu0 0.0
    %1189 = vmatpush1.msra.mxu0 0.0
    %1190 = vmatprep.subr.mxu0 0.0
    %1191 = vmatpush1.msra.mxu0 0.0
    %1192 = vmatprep.subr.mxu0 0.0
    %1193 = vmatpush1.msra.mxu0 0.0
    %1194 = vmatprep.subr.mxu0 0.0
    %1195 = vmatpush1.msra.mxu0 0.0
    %1196 = vmatprep.subr.mxu0 0.0
    %1197 = vmatpush1.msra.mxu0 0.0
    %1198 = vmatprep.subr.mxu0 0.0
    %1199 = vmatpush1.msra.mxu0 0.0
    %1200 = vmatprep.subr.mxu0 0.0
    %1201 = vmatpush1.msra.mxu0 0.0
    %1202 = vmatprep.subr.mxu0 0.0
    %1203 = vmatpush1.msra.mxu0 0.0
    %1204 = vmatprep.subr.mxu0 0.0
    %1205 = vmatpush1.msra.mxu0 0.0
    %1206 = vmatprep.subr.mxu0 0.0
    %1207 = vmatpush1.msra.mxu0 0.0
    %1208 = vmatprep.subr.mxu0 0.0
    %1209 = vmatpush1.msra.mxu0 0.0
    %1210 = vmatprep.subr.mxu0 0.0
    %1211 = vmatpush1.msra.mxu0 0.0
    %1212 = vmatprep.subr.mxu0 0.0
    %1213 = vmatpush1.msra.mxu0 0.0
    %1214 = vmatprep.subr.mxu0 0.0
    %1215 = vmatpush1.msra.mxu0 0.0
    %1216 = vmatprep.subr.mxu0 0.0
    %1217 = vmatpush1.msra.mxu0 0.0
    %1218 = vmatprep.subr.mxu0 0.0
    %1219 = vmatpush1.msra.mxu0 0.0
    %1220 = vmatprep.subr.mxu0 0.0
    %1221 = vmatpush1.msra.mxu0 0.0
    %1222 = vmatprep.subr.mxu0 0.0
    %1223 = vmatpush1.msra.mxu0 0.0
    %1224 = vmatprep.subr.mxu0 0.0
    %1225 = vmatpush1.msra.mxu0 0.0
    %1226 = vmatprep.subr.mxu0 0.0
    %1227 = vmatpush1.msra.mxu0 0.0
    %1228 = vmatprep.subr.mxu0 0.0
    %1229 = vmatpush1.msra.mxu0 0.0
    %1230 = vmatprep.mubr.f32.mxu0 0.0
    %1231 = vmatmul.mubr.f32.gmra.mrb[0].mxu0 %v1164
    %v1232 = vpop.f32.mrb[0].mxu0
    %v1233 = vadd.f32 %v72, %v1232
    %v1234 = vpop.f32.mrb[0].mxu0
    %1235 = vdwg.mxu0
    %1236 = vst [vmem:[#allocation8 + $0x30] sm:$0xff] %v1233
    %s1237 = scalar_lea.vmem [#allocation2], 56
    %v1238 = vld [vmem:[%s1237] sm:$0xff]
    %1240 = vrot.lane.b32.xlu0 %v1160, 32
    %v1241 = vpop.permute.xlu0 %1240
    %v1242 = vsel %vm97, %v1241, 0
    %1244 = vmatprep.subr.mxu0 0.0
    %1245 = vmatpush1.msra.mxu0 %v59
    %1246 = vmatprep.subr.mxu0 0.0
    %1247 = vmatpush1.msra.mxu0 %v60
    %1248 = vmatprep.subr.mxu0 0.0
    %1249 = vmatpush1.msra.mxu0 %v61
    %1250 = vmatprep.subr.mxu0 0.0
    %1251 = vmatpush1.msra.mxu0 %v62
    %1252 = vmatprep.subr.mxu0 0.0
    %1253 = vmatpush1.msra.mxu0 0.0
    %1254 = vmatprep.subr.mxu0 0.0
    %1255 = vmatpush1.msra.mxu0 0.0
    %1256 = vmatprep.subr.mxu0 0.0
    %1257 = vmatpush1.msra.mxu0 0.0
    %1258 = vmatprep.subr.mxu0 0.0
    %1259 = vmatpush1.msra.mxu0 0.0
    %1260 = vmatprep.subr.mxu0 0.0
    %1261 = vmatpush1.msra.mxu0 0.0
    %1262 = vmatprep.subr.mxu0 0.0
    %1263 = vmatpush1.msra.mxu0 0.0
    %1264 = vmatprep.subr.mxu0 0.0
    %1265 = vmatpush1.msra.mxu0 0.0
    %1266 = vmatprep.subr.mxu0 0.0
    %1267 = vmatpush1.msra.mxu0 0.0
    %1268 = vmatprep.subr.mxu0 0.0
    %1269 = vmatpush1.msra.mxu0 0.0
    %1270 = vmatprep.subr.mxu0 0.0
    %1271 = vmatpush1.msra.mxu0 0.0
    %1272 = vmatprep.subr.mxu0 0.0
    %1273 = vmatpush1.msra.mxu0 0.0
    %1274 = vmatprep.subr.mxu0 0.0
    %1275 = vmatpush1.msra.mxu0 0.0
    %1276 = vmatprep.subr.mxu0 0.0
    %1277 = vmatpush1.msra.mxu0 0.0
    %1278 = vmatprep.subr.mxu0 0.0
    %1279 = vmatpush1.msra.mxu0 0.0
    %1280 = vmatprep.subr.mxu0 0.0
    %1281 = vmatpush1.msra.mxu0 0.0
    %1282 = vmatprep.subr.mxu0 0.0
    %1283 = vmatpush1.msra.mxu0 0.0
    %1284 = vmatprep.subr.mxu0 0.0
    %1285 = vmatpush1.msra.mxu0 0.0
    %1286 = vmatprep.subr.mxu0 0.0
    %1287 = vmatpush1.msra.mxu0 0.0
    %1288 = vmatprep.subr.mxu0 0.0
    %1289 = vmatpush1.msra.mxu0 0.0
    %1290 = vmatprep.subr.mxu0 0.0
    %1291 = vmatpush1.msra.mxu0 0.0
    %1292 = vmatprep.subr.mxu0 0.0
    %1293 = vmatpush1.msra.mxu0 0.0
    %1294 = vmatprep.subr.mxu0 0.0
    %1295 = vmatpush1.msra.mxu0 0.0
    %1296 = vmatprep.subr.mxu0 0.0
    %1297 = vmatpush1.msra.mxu0 0.0
    %1298 = vmatprep.subr.mxu0 0.0
    %1299 = vmatpush1.msra.mxu0 0.0
    %1300 = vmatprep.subr.mxu0 0.0
    %1301 = vmatpush1.msra.mxu0 0.0
    %1302 = vmatprep.subr.mxu0 0.0
    %1303 = vmatpush1.msra.mxu0 0.0
    %1304 = vmatprep.subr.mxu0 0.0
    %1305 = vmatpush1.msra.mxu0 0.0
    %1306 = vmatprep.subr.mxu0 0.0
    %1307 = vmatpush1.msra.mxu0 0.0
    %1308 = vmatprep.mubr.f32.mxu0 0.0
    %1309 = vmatmul.mubr.f32.gmra.mrb[0].mxu0 %v1242
    %v1310 = vpop.f32.mrb[0].mxu0
    %v1311 = vadd.f32 0.0, %v1310
    %v1312 = vpop.f32.mrb[0].mxu0
    %1313 = vdwg.mxu0
    %v1314 = vadd.f32 %v1238, %v1311
    %v1315 = vmul.f32 %v1314, 0.5
    %v1316 = vsel %vm78, %v1314, %v1315
    %v1317 = vtanh.pop %v1316
    %v1318 = vmul.f32 %v1317, 0.5
    %v1319 = vadd.f32 %v1318, 0.5
    %v1320 = vsel %vm78, %v1317, %v1319
    %v1321 = vmul.f32 %v1320, %v1154
    %1323 = vrot.lane.b32.xlu0 %v1320, 64
    %v1324 = vpop.permute.xlu0 %1323
    %v1326 = vmul.f32 %v1320, %v1324
    %1328 = vrot.lane.b32.xlu0 %v1326, 32
    %v1329 = vpop.permute.xlu0 %1328
    %v1331 = vadd.f32 %v1321, %v1329
    %1333 = vrot.lane.b32.xlu0 %v1331, 96
    %v1334 = vpop.permute.xlu0 %1333
    %v1335 = vsel %vm97, %v1334, 0
    %1337 = vmatprep.subr.mxu0 0.0
    %1338 = vmatpush1.msra.mxu0 %v63
    %1339 = vmatprep.subr.mxu0 0.0
    %1340 = vmatpush1.msra.mxu0 %v64
    %1341 = vmatprep.subr.mxu0 0.0
    %1342 = vmatpush1.msra.mxu0 %v65
    %1343 = vmatprep.subr.mxu0 0.0
    %1344 = vmatpush1.msra.mxu0 %v66
    %1345 = vmatprep.subr.mxu0 0.0
    %1346 = vmatpush1.msra.mxu0 0.0
    %1347 = vmatprep.subr.mxu0 0.0
    %1348 = vmatpush1.msra.mxu0 0.0
    %1349 = vmatprep.subr.mxu0 0.0
    %1350 = vmatpush1.msra.mxu0 0.0
    %1351 = vmatprep.subr.mxu0 0.0
    %1352 = vmatpush1.msra.mxu0 0.0
    %1353 = vmatprep.subr.mxu0 0.0
    %1354 = vmatpush1.msra.mxu0 0.0
    %1355 = vmatprep.subr.mxu0 0.0
    %1356 = vmatpush1.msra.mxu0 0.0
    %1357 = vmatprep.subr.mxu0 0.0
    %1358 = vmatpush1.msra.mxu0 0.0
    %1359 = vmatprep.subr.mxu0 0.0
    %1360 = vmatpush1.msra.mxu0 0.0
    %1361 = vmatprep.subr.mxu0 0.0
    %1362 = vmatpush1.msra.mxu0 0.0
    %1363 = vmatprep.subr.mxu0 0.0
    %1364 = vmatpush1.msra.mxu0 0.0
    %1365 = vmatprep.subr.mxu0 0.0
    %1366 = vmatpush1.msra.mxu0 0.0
    %1367 = vmatprep.subr.mxu0 0.0
    %1368 = vmatpush1.msra.mxu0 0.0
    %1369 = vmatprep.subr.mxu0 0.0
    %1370 = vmatpush1.msra.mxu0 0.0
    %1371 = vmatprep.subr.mxu0 0.0
    %1372 = vmatpush1.msra.mxu0 0.0
    %1373 = vmatprep.subr.mxu0 0.0
    %1374 = vmatpush1.msra.mxu0 0.0
    %1375 = vmatprep.subr.mxu0 0.0
    %1376 = vmatpush1.msra.mxu0 0.0
    %1377 = vmatprep.subr.mxu0 0.0
    %1378 = vmatpush1.msra.mxu0 0.0
    %1379 = vmatprep.subr.mxu0 0.0
    %1380 = vmatpush1.msra.mxu0 0.0
    %1381 = vmatprep.subr.mxu0 0.0
    %1382 = vmatpush1.msra.mxu0 0.0
    %1383 = vmatprep.subr.mxu0 0.0
    %1384 = vmatpush1.msra.mxu0 0.0
    %1385 = vmatprep.subr.mxu0 0.0
    %1386 = vmatpush1.msra.mxu0 0.0
    %1387 = vmatprep.subr.mxu0 0.0
    %1388 = vmatpush1.msra.mxu0 0.0
    %1389 = vmatprep.subr.mxu0 0.0
    %1390 = vmatpush1.msra.mxu0 0.0
    %1391 = vmatprep.subr.mxu0 0.0
    %1392 = vmatpush1.msra.mxu0 0.0
    %1393 = vmatprep.subr.mxu0 0.0
    %1394 = vmatpush1.msra.mxu0 0.0
    %1395 = vmatprep.subr.mxu0 0.0
    %1396 = vmatpush1.msra.mxu0 0.0
    %1397 = vmatprep.subr.mxu0 0.0
    %1398 = vmatpush1.msra.mxu0 0.0
    %1399 = vmatprep.subr.mxu0 0.0
    %1400 = vmatpush1.msra.mxu0 0.0
    %1401 = vmatprep.mubr.f32.mxu0 0.0
    %1402 = vmatmul.mubr.f32.gmra.mrb[0].mxu0 %v1335
    %v1403 = vpop.f32.mrb[0].mxu0
    %v1404 = vadd.f32 %v72, %v1403
    %v1405 = vpop.f32.mrb[0].mxu0
    %1406 = vdwg.mxu0
    %1407 = vst [vmem:[#allocation8 + $0x38] sm:$0xff] %v1404
    // Predicated region
    $region30: #{tpu_custom_call.1} parent=1 // pred_check
      _
    $region31: #{tpu_custom_call.1} parent=1 // pred_check_branch
      %1409 = sbr.rel (0) target = $region33
    $region32: #{tpu_custom_call.1} parent=1 // pred_region
      %s1411 = ssub.s32 1024, 1024
      %1412 = vsyncadd [#allocation4], %s1411
      %s1413 = sshll.u32 [#allocation8], 4
      %s1414 = int_to_ptr.vmem [resolvable:$true] %s1413
      %1419 = dma.vmem_to_hbm [thread:$0]  %s1414, 1024, %s4, [#allocation4], 128, 128, 8
    $region33: #{tpu_custom_call.1} parent=1 // pred_fallthru
      _
    // Predicated region
    $region34: #{tpu_custom_call.1} parent=1 // pred_check
      _
    $region35: #{tpu_custom_call.1} parent=1 // pred_check_branch
      %1421 = sbr.rel (0) target = $region37
    $region36: #{tpu_custom_call.1} parent=1 // pred_region
      %1422 = dma.done [#allocation4], 1024
    $region37: #{tpu_custom_call.1} parent=1 // pred_fallthru
      _
    %1423 = vsyncpa [#allocation3], 1
    %1424 = vsyncpa [#allocation6], 1
    %1425 = vsyncpa [#allocation4], 1

</llo_original>
